<compile_context>
chip_gen: v5e
topology: v5e:2x2
jax: 0.10.0
libtpu: 0.0.40
codegen_flags: <defaults>
</compile_context>

<pallas_src>
import math
from functools import partial

import jax
import jax.numpy as jnp
from jax.experimental import pallas as pl
from jax.experimental.pallas import tpu as pltpu

LN_EPS = 1e-12          # BERT LayerNorm eps


def _tpu_generation():
    try:
        kind = jax.devices()[0].device_kind.lower()
    except Exception:
        return 0
    for g in (7, 6, 5, 4):
        if f"v{g}" in kind:
            return g
    return 0


_GEN = _tpu_generation()
if _GEN == 7:
    VMEM_LIMIT = 48 * 1024 * 1024      # v7x: 64 MiB physical, leave headroom
    ROW_BLOCK = 256
elif _GEN in (5, 6):
    VMEM_LIMIT = 96 * 1024 * 1024      # v5e/v6e: 128 MiB physical
    ROW_BLOCK = 512
else:
    VMEM_LIMIT = 48 * 1024 * 1024
    ROW_BLOCK = 256
GELU_TANH_BF16 = _GEN >= 6             # bf16 EUP path exists on v6e/v7x
Q_BLOCK = 256
KV_BLOCK = 256


def _cparams(*sem):
    return pltpu.CompilerParams(
        dimension_semantics=tuple(sem), vmem_limit_bytes=VMEM_LIMIT
    )


# --------------------------------------------------------------------------
# Pallas kernels
# --------------------------------------------------------------------------
def _qkv_kernel(x_ref, w_ref, b_ref, q_ref, k_ref, v_ref, *, d):
    # One wide matmul: (rb, Din) @ (Din, 3D) -> (rb, 3D), f32 accumulation.
    h = (
        jnp.dot(x_ref[...].astype(jnp.bfloat16), w_ref[...],
                preferred_element_type=jnp.float32)
        + b_ref[...]
    )
    q_ref[...] = h[:, 0 * d:1 * d].astype(q_ref.dtype)
    k_ref[...] = h[:, 1 * d:2 * d].astype(k_ref.dtype)
    v_ref[...] = h[:, 2 * d:3 * d].astype(v_ref.dtype)


def _dense_gelu_kernel(x_ref, w_ref, b_ref, o_ref, *, bf16_tanh):
    # TODO(synk): BERT's default GELU is erf-based; tanh approx used for robust lowering.
    h = (
        jnp.dot(x_ref[...].astype(jnp.bfloat16), w_ref[...],
                preferred_element_type=jnp.float32)
        + b_ref[...]
    )
    c = math.sqrt(2.0 / math.pi)
    inner = c * (h + 0.044715 * h * h * h)
    if bf16_tanh:
        t = jnp.tanh(inner.astype(jnp.bfloat16)).astype(jnp.float32)
    else:
        t = jnp.tanh(inner)
    g = 0.5 * h * (1.0 + t)
    o_ref[...] = g.astype(o_ref.dtype)


def _dense_residual_ln_kernel(x_ref, w_ref, b_ref, r_ref, g_ref, bb_ref,
                              upd_ref, str_ref, *maybe_bf16):
    # Fused: dense -> (update out) -> +residual -> LayerNorm -> (stream out[s]).
    upd = (
        jnp.dot(x_ref[...].astype(jnp.bfloat16), w_ref[...],
                preferred_element_type=jnp.float32)
        + b_ref[...]
    )
    upd_ref[...] = upd
    h = upd + r_ref[...]
    mean = jnp.mean(h, axis=-1, keepdims=True)
    var = jnp.mean(jnp.square(h - mean), axis=-1, keepdims=True)
    y = (h - mean) * jax.lax.rsqrt(var + LN_EPS) * g_ref[...] + bb_ref[...]
    str_ref[...] = y
    if maybe_bf16:                       # bf16 copy for the next matmul's input
        maybe_bf16[0][...] = y.astype(jnp.bfloat16)


def _attn_kernel(q_ref, k_ref, v_ref, o_ref, m_sc, l_sc, acc_sc, *, scale):
    # Flash-style attention; q/k/v head-major (1, H, tq|tkv, Dh) bf16 blocks.
    kv = pl.program_id(2)

    @pl.when(kv == 0)
    def _():
        m_sc[...] = jnp.full(m_sc.shape, -jnp.inf, jnp.float32)
        l_sc[...] = jnp.zeros(l_sc.shape, jnp.float32)
        acc_sc[...] = jnp.zeros(acc_sc.shape, jnp.float32)

    q = q_ref[0]        # (H, tq, Dh)  bf16 (no per-step transpose / cast)
    k = k_ref[0]        # (H, tkv, Dh) bf16
    v = v_ref[0]        # (H, tkv, Dh) bf16

    # scores: (H, tq, tkv) — bf16 MXU inputs, f32 accumulation.
    s = jnp.einsum("hqd,hkd->hqk", q, k,
                   preferred_element_type=jnp.float32) * scale
    # TODO(synk): no attention_mask support (assumes full-length sequences).

    m_prev = m_sc[...]                                   # (H, tq)
    m_new = jnp.maximum(m_prev, jnp.max(s, axis=-1))     # (H, tq)
    alpha = jnp.exp(m_prev - m_new)                      # (H, tq)
    p = jnp.exp(s - m_new[:, :, None])                   # (H, tq, tkv) f32
    l_sc[...] = alpha * l_sc[...] + jnp.sum(p, axis=-1)
    acc_sc[...] = alpha[:, :, None] * acc_sc[...] + jnp.einsum(
        "hqk,hkd->hqd", p.astype(jnp.bfloat16), v,
        preferred_element_type=jnp.float32)
    m_sc[...] = m_new

    @pl.when(kv == pl.num_programs(2) - 1)
    def _():
        ctx = acc_sc[...] / l_sc[...][:, :, None]        # exact divide (once)
        tq = ctx.shape[1]
        # (H, tq, Dh) -> (tq, H*Dh): one XLU transpose per q block, then a
        # lane-dense (tq, D) store (D >= 128 for real BERT -> unmasked vst).
        o_ref[0] = jnp.transpose(ctx, (1, 0, 2)).reshape(tq, -1).astype(o_ref.dtype)


# --------------------------------------------------------------------------
# Wrappers around pallas_call
# --------------------------------------------------------------------------
def fused_qkv(x2d, wqkv, bqkv):
    n, din = x2d.shape
    d3 = wqkv.shape[1]
    d = d3 // 3
    rb = min(ROW_BLOCK, n)
    grid = (pl.cdiv(n, rb),)
    row_in = pl.BlockSpec((rb, din), lambda i: (i, 0))
    row_out = pl.BlockSpec((rb, d), lambda i: (i, 0))
    const_w = pl.BlockSpec((din, d3), lambda i: (0, 0))
    const_b = pl.BlockSpec((1, d3), lambda i: (0, 0))
    return pl.pallas_call(
        partial(_qkv_kernel, d=d),
        out_shape=[jax.ShapeDtypeStruct((n, d), jnp.bfloat16)] * 3,
        grid=grid,
        in_specs=[row_in, const_w, const_b],
        out_specs=[row_out] * 3,
        compiler_params=_cparams("parallel"),
    )(x2d, wqkv, bqkv)


def dense_gelu(x2d, w, b):
    n, din = x2d.shape
    dout = w.shape[1]
    rb = min(ROW_BLOCK, n)
    grid = (pl.cdiv(n, rb),)
    return pl.pallas_call(
        partial(_dense_gelu_kernel, bf16_tanh=GELU_TANH_BF16),
        out_shape=jax.ShapeDtypeStruct((n, dout), jnp.bfloat16),
        grid=grid,
        in_specs=[pl.BlockSpec((rb, din), lambda i: (i, 0)),
                  pl.BlockSpec((din, dout), lambda i: (0, 0)),
                  pl.BlockSpec((1, dout), lambda i: (0, 0))],
        out_specs=pl.BlockSpec((rb, dout), lambda i: (i, 0)),
        compiler_params=_cparams("parallel"),
    )(x2d, w, b)


def dense_residual_ln(x2d, w, b, res2d, gamma, beta, emit_bf16_stream=False):
    n, din = x2d.shape
    dout = w.shape[1]
    rb = min(ROW_BLOCK, n)
    grid = (pl.cdiv(n, rb),)
    row_in = pl.BlockSpec((rb, din), lambda i: (i, 0))
    row_out = pl.BlockSpec((rb, dout), lambda i: (i, 0))
    const_w = pl.BlockSpec((din, dout), lambda i: (0, 0))
    const_v = pl.BlockSpec((1, dout), lambda i: (0, 0))
    out_shape = [jax.ShapeDtypeStruct((n, dout), jnp.float32)] * 2
    out_specs = [row_out, row_out]
    if emit_bf16_stream:
        out_shape.append(jax.ShapeDtypeStruct((n, dout), jnp.bfloat16))
        out_specs.append(row_out)
    return pl.pallas_call(
        _dense_residual_ln_kernel,
        out_shape=out_shape,
        grid=grid,
        in_specs=[row_in, const_w, const_v, row_out, const_v, const_v],
        out_specs=out_specs,
        compiler_params=_cparams("parallel"),
    )(x2d, w, b, res2d, gamma, beta)


def attention(q, k, v):
    # q, k, v: (B, H, S, Dh) bf16 head-major ; returns ctx (B, S, D) bf16.
    B, H, S, Dh = q.shape
    D = H * Dh
    tq = next((t for t in (Q_BLOCK, 128) if S % t == 0), S)
    tkv = next((t for t in (KV_BLOCK, 128) if S % t == 0), S)
    grid = (B, S // tq, S // tkv)
    scale = 1.0 / math.sqrt(Dh)
    q_spec = pl.BlockSpec((1, H, tq, Dh), lambda b, qi, ki: (b, 0, qi, 0))
    kv_spec = pl.BlockSpec((1, H, tkv, Dh), lambda b, qi, ki: (b, 0, ki, 0))
    out_spec = pl.BlockSpec((1, tq, D), lambda b, qi, ki: (b, qi, 0))
    return pl.pallas_call(
        partial(_attn_kernel, scale=scale),
        out_shape=jax.ShapeDtypeStruct((B, S, D), jnp.bfloat16),
        grid=grid,
        in_specs=[q_spec, kv_spec, kv_spec],
        out_specs=out_spec,
        scratch_shapes=[pltpu.VMEM((H, tq), jnp.float32),       # m (lane-dense)
                        pltpu.VMEM((H, tq), jnp.float32),       # l (lane-dense)
                        pltpu.VMEM((H, tq, Dh), jnp.float32)],  # acc
        compiler_params=_cparams("parallel", "parallel", "arbitrary"),
    )(q, k, v)


# --------------------------------------------------------------------------
# One BERT encoder layer (pure, jitted) + ResidualUpdateModel wrapper
# --------------------------------------------------------------------------
@partial(jax.jit, static_argnames=("num_heads",))
def bert_layer_forward(params, hidden_states, num_heads):
    B, S, D = hidden_states.shape
    H = num_heads
    Dh = D // H
    N = B * S
    x2d = hidden_states.reshape(N, D)

    # --- fused Q/K/V projection (one wide matmul) ---
    q, k, v = fused_qkv(x2d, params["wqkv"], params["bqkv"])
    # One-time head-major relayout (B, H, S, Dh); no in-kernel transposes.
    q = jnp.transpose(q.reshape(B, S, H, Dh), (0, 2, 1, 3))
    k = jnp.transpose(k.reshape(B, S, H, Dh), (0, 2, 1, 3))
    v = jnp.transpose(v.reshape(B, S, H, Dh), (0, 2, 1, 3))

    # --- self-attention (flash-style, q- and kv-tiled) ---
    ctx = attention(q, k, v)                  # (B, S, D) bf16, lane-dense
    ctx2d = ctx.reshape(N, D)                 # contiguous: metadata only

    # --- attention.output: dense + residual + LayerNorm (fused) ---
    attn_update, attn_stream, attn_stream_bf16 = dense_residual_ln(
        ctx2d, params["wo"], params["bo"], x2d,
        params["ln1_g"], params["ln1_b"], emit_bf16_stream=True)

    # --- feed-forward: intermediate dense + GELU, then dense + residual + LN ---
    inter = dense_gelu(attn_stream_bf16, params["wi"], params["bi"])
    mlp_update, mlp_stream = dense_residual_ln(
        inter, params["wf"], params["bf"], attn_stream,
        params["ln2_g"], params["ln2_b"], emit_bf16_stream=False)

    return (mlp_stream.reshape(B, S, D),
            attn_update.reshape(B, S, D), attn_stream.reshape(B, S, D),
            mlp_update.reshape(B, S, D), mlp_stream.reshape(B, S, D))


class ResidualUpdateModelConfig:
    def __init__(self, model_type, target_layers, mlp, attn, updates, stream):
        self.model_type = model_type
        self.target_layers = target_layers
        self.mlp = mlp
        self.attn = attn
        self.updates = updates
        self.stream = stream


class PallasResidualUpdateModel:
    """Pallas reimplementation of ResidualUpdateModel wrapping one BERT layer.

    PyTorch forward hooks are emulated by returning the hooked tensors from the
    jitted forward and storing them (f32) in vector_cache.
    """

    def __init__(self, config, params, num_heads):
        self.config = config
        self.params = params
        self.num_heads = num_heads
        self.vector_cache = {}

    def forward(self, hidden_states):
        out, attn_update, attn_stream, mlp_update, mlp_stream = bert_layer_forward(
            self.params, hidden_states, num_heads=self.num_heads)
        for i in self.config.target_layers:
            if self.config.attn:
                if self.config.updates:
                    self.vector_cache["attn_update_" + str(i)] = attn_update
                if self.config.stream:
                    self.vector_cache["attn_stream_" + str(i)] = attn_stream
            if self.config.mlp:
                if self.config.updates:
                    self.vector_cache["mlp_update_" + str(i)] = mlp_update
                if self.config.stream:
                    self.vector_cache["mlp_stream_" + str(i)] = mlp_stream
        return out

    __call__ = forward


def init_params(key, hidden, intermediate):
    keys = jax.random.split(key, 8)

    def w(k, shape):
        # bf16 weight storage (MXU-friendly), f32 accumulation in-kernel.
        return (jax.random.normal(k, shape, jnp.float32) * 0.02).astype(jnp.bfloat16)

    def b(k, dout):
        return jax.random.normal(k, (1, dout), jnp.float32) * 0.02

    params = {
        "wqkv": w(keys[0], (hidden, 3 * hidden)),
        "bqkv": b(keys[1], 3 * hidden),
        "wo": w(keys[2], (hidden, hidden)),
        "bo": b(keys[3], hidden),
        "wi": w(keys[4], (hidden, intermediate)),
        "bi": b(keys[5], intermediate),
        "wf": w(keys[6], (intermediate, hidden)),
        "bf": b(keys[7], hidden),
        "ln1_g": jnp.ones((1, hidden), jnp.float32),
        "ln1_b": jnp.zeros((1, hidden), jnp.float32),
        "ln2_g": jnp.ones((1, hidden), jnp.float32),
        "ln2_b": jnp.zeros((1, hidden), jnp.float32),
    }
    return params


if __name__ == "__main__":
    B, S, D, H, FF = 2, 8, 32, 2, 64

    key = jax.random.PRNGKey(0)
    k_x, k_p = jax.random.split(key)
    hidden_states = jax.random.normal(k_x, (B, S, D), jnp.float32)
    params = init_params(k_p, D, FF)

    config = ResidualUpdateModelConfig(
        model_type="bert", target_layers=[0],
        mlp=True, attn=True, updates=True, stream=True,
    )
    model = PallasResidualUpdateModel(config, params, num_heads=H)

    out = model(hidden_states)
    jax.block_until_ready(out)
    for cached in model.vector_cache.values():
        jax.block_until_ready(cached)

    assert out.shape == (B, S, D)
    assert set(model.vector_cache.keys()) == {
        "attn_update_0", "attn_stream_0", "mlp_update_0", "mlp_stream_0"
    }
    assert bool(jnp.all(jnp.isfinite(out)))
    print("KERNEL_OK")
</pallas_src>

<mosaic_0001>
module attributes {stable_mosaic.version = 11 : i64} {
  func.func @_qkv_kernel(%arg0: i32, %arg1: memref<16x32xf32, #tpu.memory_space<vmem>>, %arg2: memref<32x96xbf16, #tpu.memory_space<vmem>>, %arg3: memref<1x96xf32, #tpu.memory_space<vmem>>, %arg4: memref<16x32xbf16, #tpu.memory_space<vmem>>, %arg5: memref<16x32xbf16, #tpu.memory_space<vmem>>, %arg6: memref<16x32xbf16, #tpu.memory_space<vmem>>) attributes {dimension_semantics = [#tpu.dimension_semantics<parallel>], iteration_bounds = array<i64: 1>, scalar_prefetch = 0 : i64, scratch_operands = 0 : i64, tpu.core_type = #tpu.core_type<tc>, window_params = [{transform_indices = @transform_0, window_bounds = array<i64: 16, 32>}, {pipeline_mode = #tpu.pipeline_mode<synchronous>, transform_indices = @transform_1, window_bounds = array<i64: 32, 96>}, {pipeline_mode = #tpu.pipeline_mode<synchronous>, transform_indices = @transform_2, window_bounds = array<i64: 1, 96>}, {transform_indices = @transform_3, window_bounds = array<i64: 16, 32>}, {transform_indices = @transform_4, window_bounds = array<i64: 16, 32>}, {transform_indices = @transform_5, window_bounds = array<i64: 16, 32>}]} {
    %c0 = arith.constant 0 : index
    %c0_0 = arith.constant 0 : index
    %0 = vector.load %arg1[%c0, %c0_0] : memref<16x32xf32, #tpu.memory_space<vmem>>, vector<16x32xf32>
    %1 = arith.truncf %0 : vector<16x32xf32> to vector<16x32xbf16>
    %c0_1 = arith.constant 0 : index
    %c0_2 = arith.constant 0 : index
    %2 = vector.load %arg2[%c0_1, %c0_2] : memref<32x96xbf16, #tpu.memory_space<vmem>>, vector<32x96xbf16>
    %cst = arith.constant dense<0.000000e+00> : vector<16x96xf32>
    %3 = tpu.matmul %1, %2, %cst {dimension_numbers = #tpu.dot_dimension_numbers<[1], [0], [0], [1], [0, 0, 1, 1], [], []>} : vector<16x32xbf16>, vector<32x96xbf16>, vector<16x96xf32> -> vector<16x96xf32>
    %c0_3 = arith.constant 0 : index
    %c0_4 = arith.constant 0 : index
    %4 = vector.load %arg3[%c0_3, %c0_4] : memref<1x96xf32, #tpu.memory_space<vmem>>, vector<1x96xf32>
    %5 = vector.broadcast %4 : vector<1x96xf32> to vector<16x96xf32>
    %6 = arith.addf %3, %5 : vector<16x96xf32>
    %7 = vector.extract_strided_slice %6 {offsets = [0, 0], sizes = [16, 32], strides = [1, 1]} : vector<16x96xf32> to vector<16x32xf32>
    %8 = arith.truncf %7 : vector<16x32xf32> to vector<16x32xbf16>
    %c0_5 = arith.constant 0 : index
    %c0_6 = arith.constant 0 : index
    %9 = vector.load %arg4[%c0_5, %c0_6] : memref<16x32xbf16, #tpu.memory_space<vmem>>, vector<16x32xbf16>
    tpu.vector_store %arg4[%c0_5, %c0_6], %8 {strides = array<i32>} : memref<16x32xbf16, #tpu.memory_space<vmem>>, vector<16x32xbf16>,
    %10 = vector.extract_strided_slice %6 {offsets = [0, 32], sizes = [16, 32], strides = [1, 1]} : vector<16x96xf32> to vector<16x32xf32>
    %11 = arith.truncf %10 : vector<16x32xf32> to vector<16x32xbf16>
    %c0_7 = arith.constant 0 : index
    %c0_8 = arith.constant 0 : index
    %12 = vector.load %arg5[%c0_7, %c0_8] : memref<16x32xbf16, #tpu.memory_space<vmem>>, vector<16x32xbf16>
    tpu.vector_store %arg5[%c0_7, %c0_8], %11 {strides = array<i32>} : memref<16x32xbf16, #tpu.memory_space<vmem>>, vector<16x32xbf16>,
    %13 = vector.extract_strided_slice %6 {offsets = [0, 64], sizes = [16, 32], strides = [1, 1]} : vector<16x96xf32> to vector<16x32xf32>
    %14 = arith.truncf %13 : vector<16x32xf32> to vector<16x32xbf16>
    %c0_9 = arith.constant 0 : index
    %c0_10 = arith.constant 0 : index
    %15 = vector.load %arg6[%c0_9, %c0_10] : memref<16x32xbf16, #tpu.memory_space<vmem>>, vector<16x32xbf16>
    tpu.vector_store %arg6[%c0_9, %c0_10], %14 {strides = array<i32>} : memref<16x32xbf16, #tpu.memory_space<vmem>>, vector<16x32xbf16>,
    return
  }
  func.func @transform_0(%arg0: i32) -> (i32, i32) {
    %c0_i32 = arith.constant 0 : i32
    %c0_i32_0 = arith.constant 0 : i32
    return %arg0, %c0_i32 : i32, i32
  }
  func.func @transform_1(%arg0: i32) -> (i32, i32) {
    %c0_i32 = arith.constant 0 : i32
    %c0_i32_0 = arith.constant 0 : i32
    %c0_i32_1 = arith.constant 0 : i32
    return %c0_i32, %c0_i32_0 : i32, i32
  }
  func.func @transform_2(%arg0: i32) -> (i32, i32) {
    %c0_i32 = arith.constant 0 : i32
    %c0_i32_0 = arith.constant 0 : i32
    %c0_i32_1 = arith.constant 0 : i32
    return %c0_i32, %c0_i32_0 : i32, i32
  }
  func.func @transform_3(%arg0: i32) -> (i32, i32) {
    %c0_i32 = arith.constant 0 : i32
    %c0_i32_0 = arith.constant 0 : i32
    return %arg0, %c0_i32 : i32, i32
  }
  func.func @transform_4(%arg0: i32) -> (i32, i32) {
    %c0_i32 = arith.constant 0 : i32
    %c0_i32_0 = arith.constant 0 : i32
    return %arg0, %c0_i32 : i32, i32
  }
  func.func @transform_5(%arg0: i32) -> (i32, i32) {
    %c0_i32 = arith.constant 0 : i32
    %c0_i32_0 = arith.constant 0 : i32
    return %arg0, %c0_i32 : i32, i32
  }
}

module attributes {stable_mosaic.version = 11 : i64} {
  func.func @_attn_kernel(%arg0: i32, %arg1: i32, %arg2: i32, %arg3: memref<1x2x8x16xbf16, #tpu.memory_space<vmem>>, %arg4: memref<1x2x8x16xbf16, #tpu.memory_space<vmem>>, %arg5: memref<1x2x8x16xbf16, #tpu.memory_space<vmem>>, %arg6: memref<1x8x32xbf16, #tpu.memory_space<vmem>>, %arg7: memref<2x8xf32, #tpu.memory_space<vmem>>, %arg8: memref<2x8xf32, #tpu.memory_space<vmem>>, %arg9: memref<2x8x16xf32, #tpu.memory_space<vmem>>) attributes {dimension_semantics = [#tpu.dimension_semantics<parallel>, #tpu.dimension_semantics<parallel>, #tpu.dimension_semantics<arbitrary>], iteration_bounds = array<i64: 2, 1, 1>, scalar_prefetch = 0 : i64, scratch_operands = 3 : i64, tpu.core_type = #tpu.core_type<tc>, window_params = [{transform_indices = @transform_0, window_bounds = array<i64: 1, 2, 8, 16>}, {transform_indices = @transform_1, window_bounds = array<i64: 1, 2, 8, 16>}, {transform_indices = @transform_2, window_bounds = array<i64: 1, 2, 8, 16>}, {transform_indices = @transform_3, window_bounds = array<i64: 1, 8, 32>}]} {
    %c0_i32 = arith.constant 0 : i32
    %0 = arith.cmpi eq, %arg2, %c0_i32 : i32
    %1 = arith.extui %0 : i1 to i32
    %c0_i32_0 = arith.constant 0 : i32
    %2 = arith.cmpi ne, %1, %c0_i32_0 : i32
    scf.if %2 {
      %cst_32 = arith.constant 0xFF800000 : f32
      %38 = vector.broadcast %cst_32 : f32 to vector<2x8xf32>
      %c0_33 = arith.constant 0 : index
      %c0_34 = arith.constant 0 : index
      %39 = vector.load %arg7[%c0_33, %c0_34] : memref<2x8xf32, #tpu.memory_space<vmem>>, vector<2x8xf32>
      tpu.vector_store %arg7[%c0_33, %c0_34], %38 {strides = array<i32>} : memref<2x8xf32, #tpu.memory_space<vmem>>, vector<2x8xf32>,
      %cst_35 = arith.constant 0.000000e+00 : f32
      %40 = vector.broadcast %cst_35 : f32 to vector<2x8xf32>
      %c0_36 = arith.constant 0 : index
      %c0_37 = arith.constant 0 : index
      %41 = vector.load %arg8[%c0_36, %c0_37] : memref<2x8xf32, #tpu.memory_space<vmem>>, vector<2x8xf32>
      tpu.vector_store %arg8[%c0_36, %c0_37], %40 {strides = array<i32>} : memref<2x8xf32, #tpu.memory_space<vmem>>, vector<2x8xf32>,
      %cst_38 = arith.constant 0.000000e+00 : f32
      %42 = vector.broadcast %cst_38 : f32 to vector<2x8x16xf32>
      %c0_39 = arith.constant 0 : index
      %c0_40 = arith.constant 0 : index
      %c0_41 = arith.constant 0 : index
      %43 = vector.load %arg9[%c0_39, %c0_40, %c0_41] : memref<2x8x16xf32, #tpu.memory_space<vmem>>, vector<2x8x16xf32>
      tpu.vector_store %arg9[%c0_39, %c0_40, %c0_41], %42 {strides = array<i32>} : memref<2x8x16xf32, #tpu.memory_space<vmem>>, vector<2x8x16xf32>,
    } else {
    }
    %c0 = arith.constant 0 : index
    %c0_1 = arith.constant 0 : index
    %c0_2 = arith.constant 0 : index
    %c0_3 = arith.constant 0 : index
    %3 = vector.load %arg3[%c0, %c0_1, %c0_2, %c0_3] : memref<1x2x8x16xbf16, #tpu.memory_space<vmem>>, vector<1x2x8x16xbf16>
    %4 = vector.shape_cast %3 : vector<1x2x8x16xbf16> to vector<2x8x16xbf16>
    %c0_4 = arith.constant 0 : index
    %c0_5 = arith.constant 0 : index
    %c0_6 = arith.constant 0 : index
    %c0_7 = arith.constant 0 : index
    %5 = vector.load %arg4[%c0_4, %c0_5, %c0_6, %c0_7] : memref<1x2x8x16xbf16, #tpu.memory_space<vmem>>, vector<1x2x8x16xbf16>
    %6 = vector.shape_cast %5 : vector<1x2x8x16xbf16> to vector<2x8x16xbf16>
    %c0_8 = arith.constant 0 : index
    %c0_9 = arith.constant 0 : index
    %c0_10 = arith.constant 0 : index
    %c0_11 = arith.constant 0 : index
    %7 = vector.load %arg5[%c0_8, %c0_9, %c0_10, %c0_11] : memref<1x2x8x16xbf16, #tpu.memory_space<vmem>>, vector<1x2x8x16xbf16>
    %8 = vector.shape_cast %7 : vector<1x2x8x16xbf16> to vector<2x8x16xbf16>
    "tpu.trace_start"() <{level = 10 : i32, message = "hqd,hkd->hqk"}> : () -> ()
    %cst = arith.constant dense<0.000000e+00> : vector<2x8x8xf32>
    %9 = tpu.matmul %4, %6, %cst {dimension_numbers = #tpu.dot_dimension_numbers<[2], [2], [1], [1], [0, 0, 0, 1, 1, 1], [0], [0]>} : vector<2x8x16xbf16>, vector<2x8x16xbf16>, vector<2x8x8xf32> -> vector<2x8x8xf32>
    "tpu.trace_stop"() : () -> ()
    %cst_12 = arith.constant 2.500000e-01 : f32
    %10 = vector.broadcast %cst_12 : f32 to vector<2x8x8xf32>
    %11 = arith.mulf %9, %10 : vector<2x8x8xf32>
    %c0_13 = arith.constant 0 : index
    %c0_14 = arith.constant 0 : index
    %12 = vector.load %arg7[%c0_13, %c0_14] : memref<2x8xf32, #tpu.memory_space<vmem>>, vector<2x8xf32>
    %cst_15 = arith.constant dense<0xFF800000> : vector<2x8xf32>
    %13 = vector.multi_reduction <maximumf>, %11, %cst_15 [2] : vector<2x8x8xf32> to vector<2x8xf32>
    %14 = arith.maximumf %12, %13 : vector<2x8xf32>
    %15 = arith.subf %12, %14 : vector<2x8xf32>
    %16 = math.exp %15 : vector<2x8xf32>
    %17 = vector.shape_cast %14 : vector<2x8xf32> to vector<2x8x1xf32>
    %18 = vector.broadcast %17 : vector<2x8x1xf32> to vector<2x8x8xf32>
    %19 = arith.subf %11, %18 : vector<2x8x8xf32>
    %20 = math.exp %19 : vector<2x8x8xf32>
    %c0_16 = arith.constant 0 : index
    %c0_17 = arith.constant 0 : index
    %21 = vector.load %arg8[%c0_16, %c0_17] : memref<2x8xf32, #tpu.memory_space<vmem>>, vector<2x8xf32>
    %22 = arith.mulf %16, %21 : vector<2x8xf32>
    %cst_18 = arith.constant dense<0.000000e+00> : vector<2x8xf32>
    %23 = vector.multi_reduction <add>, %20, %cst_18 [2] : vector<2x8x8xf32> to vector<2x8xf32>
    %24 = arith.addf %22, %23 : vector<2x8xf32>
    %c0_19 = arith.constant 0 : index
    %c0_20 = arith.constant 0 : index
    %25 = vector.load %arg8[%c0_19, %c0_20] : memref<2x8xf32, #tpu.memory_space<vmem>>, vector<2x8xf32>
    tpu.vector_store %arg8[%c0_19, %c0_20], %24 {strides = array<i32>} : memref<2x8xf32, #tpu.memory_space<vmem>>, vector<2x8xf32>,
    %26 = vector.shape_cast %16 : vector<2x8xf32> to vector<2x8x1xf32>
    %c0_21 = arith.constant 0 : index
    %c0_22 = arith.constant 0 : index
    %c0_23 = arith.constant 0 : index
    %27 = vector.load %arg9[%c0_21, %c0_22, %c0_23] : memref<2x8x16xf32, #tpu.memory_space<vmem>>, vector<2x8x16xf32>
    %28 = vector.broadcast %26 : vector<2x8x1xf32> to vector<2x8x16xf32>
    %29 = arith.mulf %28, %27 : vector<2x8x16xf32>
    %30 = arith.truncf %20 : vector<2x8x8xf32> to vector<2x8x8xbf16>
    "tpu.trace_start"() <{level = 10 : i32, message = "hqk,hkd->hqd"}> : () -> ()
    %cst_24 = arith.constant dense<0.000000e+00> : vector<2x8x16xf32>
    %31 = tpu.matmul %30, %8, %cst_24 {dimension_numbers = #tpu.dot_dimension_numbers<[2], [1], [1], [2], [0, 0, 0, 1, 1, 2], [0], [0]>} : vector<2x8x8xbf16>, vector<2x8x16xbf16>, vector<2x8x16xf32> -> vector<2x8x16xf32>
    "tpu.trace_stop"() : () -> ()
    %32 = arith.addf %29, %31 : vector<2x8x16xf32>
    %c0_25 = arith.constant 0 : index
    %c0_26 = arith.constant 0 : index
    %c0_27 = arith.constant 0 : index
    %33 = vector.load %arg9[%c0_25, %c0_26, %c0_27] : memref<2x8x16xf32, #tpu.memory_space<vmem>>, vector<2x8x16xf32>
    tpu.vector_store %arg9[%c0_25, %c0_26, %c0_27], %32 {strides = array<i32>} : memref<2x8x16xf32, #tpu.memory_space<vmem>>, vector<2x8x16xf32>,
    %c0_28 = arith.constant 0 : index
    %c0_29 = arith.constant 0 : index
    %34 = vector.load %arg7[%c0_28, %c0_29] : memref<2x8xf32, #tpu.memory_space<vmem>>, vector<2x8xf32>
    tpu.vector_store %arg7[%c0_28, %c0_29], %14 {strides = array<i32>} : memref<2x8xf32, #tpu.memory_space<vmem>>, vector<2x8xf32>,
    %c0_i32_30 = arith.constant 0 : i32
    %35 = arith.cmpi eq, %arg2, %c0_i32_30 : i32
    %36 = arith.extui %35 : i1 to i32
    %c0_i32_31 = arith.constant 0 : i32
    %37 = arith.cmpi ne, %36, %c0_i32_31 : i32
    scf.if %37 {
      %c0_32 = arith.constant 0 : index
      %c0_33 = arith.constant 0 : index
      %c0_34 = arith.constant 0 : index
      %38 = vector.load %arg9[%c0_32, %c0_33, %c0_34] : memref<2x8x16xf32, #tpu.memory_space<vmem>>, vector<2x8x16xf32>
      %c0_35 = arith.constant 0 : index
      %c0_36 = arith.constant 0 : index
      %39 = vector.load %arg8[%c0_35, %c0_36] : memref<2x8xf32, #tpu.memory_space<vmem>>, vector<2x8xf32>
      %40 = vector.shape_cast %39 : vector<2x8xf32> to vector<2x8x1xf32>
      %41 = vector.broadcast %40 : vector<2x8x1xf32> to vector<2x8x16xf32>
      %42 = arith.divf %38, %41 : vector<2x8x16xf32>
      %43 = tpu.transpose %42, [1, 0, 2] : vector<2x8x16xf32> -> vector<8x2x16xf32>
      %44 = vector.shape_cast %43 : vector<8x2x16xf32> to vector<8x32xf32>
      %45 = arith.truncf %44 : vector<8x32xf32> to vector<8x32xbf16>
      %c0_37 = arith.constant 0 : index
      %c0_38 = arith.constant 0 : index
      %c0_39 = arith.constant 0 : index
      %46 = vector.load %arg6[%c0_37, %c0_38, %c0_39] : memref<1x8x32xbf16, #tpu.memory_space<vmem>>, vector<1x8x32xbf16>
      %47 = vector.shape_cast %46 : vector<1x8x32xbf16> to vector<8x32xbf16>
      %48 = vector.shape_cast %45 : vector<8x32xbf16> to vector<1x8x32xbf16>
      tpu.vector_store %arg6[%c0_37, %c0_38, %c0_39], %48 {strides = array<i32>} : memref<1x8x32xbf16, #tpu.memory_space<vmem>>, vector<1x8x32xbf16>,
    } else {
    }
    return
  }
  func.func @transform_0(%arg0: i32, %arg1: i32, %arg2: i32) -> (i32, i32, i32, i32) {
    %c0_i32 = arith.constant 0 : i32
    %c0_i32_0 = arith.constant 0 : i32
    %c0_i32_1 = arith.constant 0 : i32
    return %arg0, %c0_i32, %arg1, %c0_i32_0 : i32, i32, i32, i32
  }
  func.func @transform_1(%arg0: i32, %arg1: i32, %arg2: i32) -> (i32, i32, i32, i32) {
    %c0_i32 = arith.constant 0 : i32
    %c0_i32_0 = arith.constant 0 : i32
    %c0_i32_1 = arith.constant 0 : i32
    return %arg0, %c0_i32, %arg2, %c0_i32_0 : i32, i32, i32, i32
  }
  func.func @transform_2(%arg0: i32, %arg1: i32, %arg2: i32) -> (i32, i32, i32, i32) {
    %c0_i32 = arith.constant 0 : i32
    %c0_i32_0 = arith.constant 0 : i32
    %c0_i32_1 = arith.constant 0 : i32
    return %arg0, %c0_i32, %arg2, %c0_i32_0 : i32, i32, i32, i32
  }
  func.func @transform_3(%arg0: i32, %arg1: i32, %arg2: i32) -> (i32, i32, i32) {
    %c0_i32 = arith.constant 0 : i32
    %c0_i32_0 = arith.constant 0 : i32
    return %arg0, %arg1, %c0_i32 : i32, i32, i32
  }
}

module attributes {stable_mosaic.version = 11 : i64} {
  func.func @_dense_residual_ln_kernel(%arg0: i32, %arg1: memref<16x32xbf16, #tpu.memory_space<vmem>>, %arg2: memref<32x32xbf16, #tpu.memory_space<vmem>>, %arg3: memref<1x32xf32, #tpu.memory_space<vmem>>, %arg4: memref<16x32xf32, #tpu.memory_space<vmem>>, %arg5: memref<1x32xf32, #tpu.memory_space<vmem>>, %arg6: memref<1x32xf32, #tpu.memory_space<vmem>>, %arg7: memref<16x32xf32, #tpu.memory_space<vmem>>, %arg8: memref<16x32xf32, #tpu.memory_space<vmem>>, %arg9: memref<16x32xbf16, #tpu.memory_space<vmem>>) attributes {dimension_semantics = [#tpu.dimension_semantics<parallel>], iteration_bounds = array<i64: 1>, scalar_prefetch = 0 : i64, scratch_operands = 0 : i64, tpu.core_type = #tpu.core_type<tc>, window_params = [{transform_indices = @transform_0, window_bounds = array<i64: 16, 32>}, {pipeline_mode = #tpu.pipeline_mode<synchronous>, transform_indices = @transform_1, window_bounds = array<i64: 32, 32>}, {pipeline_mode = #tpu.pipeline_mode<synchronous>, transform_indices = @transform_2, window_bounds = array<i64: 1, 32>}, {transform_indices = @transform_3, window_bounds = array<i64: 16, 32>}, {pipeline_mode = #tpu.pipeline_mode<synchronous>, transform_indices = @transform_4, window_bounds = array<i64: 1, 32>}, {pipeline_mode = #tpu.pipeline_mode<synchronous>, transform_indices = @transform_5, window_bounds = array<i64: 1, 32>}, {transform_indices = @transform_6, window_bounds = array<i64: 16, 32>}, {transform_indices = @transform_7, window_bounds = array<i64: 16, 32>}, {transform_indices = @transform_8, window_bounds = array<i64: 16, 32>}]} {
    %c0 = arith.constant 0 : index
    %c0_0 = arith.constant 0 : index
    %0 = vector.load %arg1[%c0, %c0_0] : memref<16x32xbf16, #tpu.memory_space<vmem>>, vector<16x32xbf16>
    %c0_1 = arith.constant 0 : index
    %c0_2 = arith.constant 0 : index
    %1 = vector.load %arg2[%c0_1, %c0_2] : memref<32x32xbf16, #tpu.memory_space<vmem>>, vector<32x32xbf16>
    %cst = arith.constant dense<0.000000e+00> : vector<16x32xf32>
    %2 = tpu.matmul %0, %1, %cst {dimension_numbers = #tpu.dot_dimension_numbers<[1], [0], [0], [1], [0, 0, 1, 1], [], []>} : vector<16x32xbf16>, vector<32x32xbf16>, vector<16x32xf32> -> vector<16x32xf32>
    %c0_3 = arith.constant 0 : index
    %c0_4 = arith.constant 0 : index
    %3 = vector.load %arg3[%c0_3, %c0_4] : memref<1x32xf32, #tpu.memory_space<vmem>>, vector<1x32xf32>
    %4 = vector.broadcast %3 : vector<1x32xf32> to vector<16x32xf32>
    %5 = arith.addf %2, %4 : vector<16x32xf32>
    %c0_5 = arith.constant 0 : index
    %c0_6 = arith.constant 0 : index
    %6 = vector.load %arg7[%c0_5, %c0_6] : memref<16x32xf32, #tpu.memory_space<vmem>>, vector<16x32xf32>
    tpu.vector_store %arg7[%c0_5, %c0_6], %5 {strides = array<i32>} : memref<16x32xf32, #tpu.memory_space<vmem>>, vector<16x32xf32>,
    %c0_7 = arith.constant 0 : index
    %c0_8 = arith.constant 0 : index
    %7 = vector.load %arg4[%c0_7, %c0_8] : memref<16x32xf32, #tpu.memory_space<vmem>>, vector<16x32xf32>
    %8 = arith.addf %5, %7 : vector<16x32xf32>
    %cst_9 = arith.constant dense<0.000000e+00> : vector<16xf32>
    %9 = vector.multi_reduction <add>, %8, %cst_9 [1] : vector<16x32xf32> to vector<16xf32>
    %10 = vector.shape_cast %9 : vector<16xf32> to vector<16x1xf32>
    %cst_10 = arith.constant 3.200000e+01 : f32
    %11 = vector.broadcast %cst_10 : f32 to vector<16x1xf32>
    %12 = arith.divf %10, %11 : vector<16x1xf32>
    %13 = vector.broadcast %12 : vector<16x1xf32> to vector<16x32xf32>
    %14 = arith.subf %8, %13 : vector<16x32xf32>
    %15 = arith.mulf %14, %14 : vector<16x32xf32>
    %cst_11 = arith.constant dense<0.000000e+00> : vector<16xf32>
    %16 = vector.multi_reduction <add>, %15, %cst_11 [1] : vector<16x32xf32> to vector<16xf32>
    %17 = vector.shape_cast %16 : vector<16xf32> to vector<16x1xf32>
    %cst_12 = arith.constant 3.200000e+01 : f32
    %18 = vector.broadcast %cst_12 : f32 to vector<16x1xf32>
    %19 = arith.divf %17, %18 : vector<16x1xf32>
    %20 = vector.broadcast %12 : vector<16x1xf32> to vector<16x32xf32>
    %21 = arith.subf %8, %20 : vector<16x32xf32>
    %cst_13 = arith.constant 9.99999996E-13 : f32
    %22 = vector.broadcast %cst_13 : f32 to vector<16x1xf32>
    %23 = arith.addf %19, %22 : vector<16x1xf32>
    %24 = math.rsqrt %23 : vector<16x1xf32>
    %25 = vector.broadcast %24 : vector<16x1xf32> to vector<16x32xf32>
    %26 = arith.mulf %21, %25 : vector<16x32xf32>
    %c0_14 = arith.constant 0 : index
    %c0_15 = arith.constant 0 : index
    %27 = vector.load %arg5[%c0_14, %c0_15] : memref<1x32xf32, #tpu.memory_space<vmem>>, vector<1x32xf32>
    %28 = vector.broadcast %27 : vector<1x32xf32> to vector<16x32xf32>
    %29 = arith.mulf %26, %28 : vector<16x32xf32>
    %c0_16 = arith.constant 0 : index
    %c0_17 = arith.constant 0 : index
    %30 = vector.load %arg6[%c0_16, %c0_17] : memref<1x32xf32, #tpu.memory_space<vmem>>, vector<1x32xf32>
    %31 = vector.broadcast %30 : vector<1x32xf32> to vector<16x32xf32>
    %32 = arith.addf %29, %31 : vector<16x32xf32>
    %c0_18 = arith.constant 0 : index
    %c0_19 = arith.constant 0 : index
    %33 = vector.load %arg8[%c0_18, %c0_19] : memref<16x32xf32, #tpu.memory_space<vmem>>, vector<16x32xf32>
    tpu.vector_store %arg8[%c0_18, %c0_19], %32 {strides = array<i32>} : memref<16x32xf32, #tpu.memory_space<vmem>>, vector<16x32xf32>,
    %34 = arith.truncf %32 : vector<16x32xf32> to vector<16x32xbf16>
    %c0_20 = arith.constant 0 : index
    %c0_21 = arith.constant 0 : index
    %35 = vector.load %arg9[%c0_20, %c0_21] : memref<16x32xbf16, #tpu.memory_space<vmem>>, vector<16x32xbf16>
    tpu.vector_store %arg9[%c0_20, %c0_21], %34 {strides = array<i32>} : memref<16x32xbf16, #tpu.memory_space<vmem>>, vector<16x32xbf16>,
    return
  }
  func.func @transform_0(%arg0: i32) -> (i32, i32) {
    %c0_i32 = arith.constant 0 : i32
    %c0_i32_0 = arith.constant 0 : i32
    return %arg0, %c0_i32 : i32, i32
  }
  func.func @transform_1(%arg0: i32) -> (i32, i32) {
    %c0_i32 = arith.constant 0 : i32
    %c0_i32_0 = arith.constant 0 : i32
    %c0_i32_1 = arith.constant 0 : i32
    return %c0_i32, %c0_i32_0 : i32, i32
  }
  func.func @transform_2(%arg0: i32) -> (i32, i32) {
    %c0_i32 = arith.constant 0 : i32
    %c0_i32_0 = arith.constant 0 : i32
    %c0_i32_1 = arith.constant 0 : i32
    return %c0_i32, %c0_i32_0 : i32, i32
  }
  func.func @transform_3(%arg0: i32) -> (i32, i32) {
    %c0_i32 = arith.constant 0 : i32
    %c0_i32_0 = arith.constant 0 : i32
    return %arg0, %c0_i32 : i32, i32
  }
  func.func @transform_4(%arg0: i32) -> (i32, i32) {
    %c0_i32 = arith.constant 0 : i32
    %c0_i32_0 = arith.constant 0 : i32
    %c0_i32_1 = arith.constant 0 : i32
    return %c0_i32, %c0_i32_0 : i32, i32
  }
  func.func @transform_5(%arg0: i32) -> (i32, i32) {
    %c0_i32 = arith.constant 0 : i32
    %c0_i32_0 = arith.constant 0 : i32
    %c0_i32_1 = arith.constant 0 : i32
    return %c0_i32, %c0_i32_0 : i32, i32
  }
  func.func @transform_6(%arg0: i32) -> (i32, i32) {
    %c0_i32 = arith.constant 0 : i32
    %c0_i32_0 = arith.constant 0 : i32
    return %arg0, %c0_i32 : i32, i32
  }
  func.func @transform_7(%arg0: i32) -> (i32, i32) {
    %c0_i32 = arith.constant 0 : i32
    %c0_i32_0 = arith.constant 0 : i32
    return %arg0, %c0_i32 : i32, i32
  }
  func.func @transform_8(%arg0: i32) -> (i32, i32) {
    %c0_i32 = arith.constant 0 : i32
    %c0_i32_0 = arith.constant 0 : i32
    return %arg0, %c0_i32 : i32, i32
  }
}

module attributes {stable_mosaic.version = 11 : i64} {
  func.func @_dense_gelu_kernel(%arg0: i32, %arg1: memref<16x32xbf16, #tpu.memory_space<vmem>>, %arg2: memref<32x64xbf16, #tpu.memory_space<vmem>>, %arg3: memref<1x64xf32, #tpu.memory_space<vmem>>, %arg4: memref<16x64xbf16, #tpu.memory_space<vmem>>) attributes {dimension_semantics = [#tpu.dimension_semantics<parallel>], iteration_bounds = array<i64: 1>, scalar_prefetch = 0 : i64, scratch_operands = 0 : i64, tpu.core_type = #tpu.core_type<tc>, window_params = [{transform_indices = @transform_0, window_bounds = array<i64: 16, 32>}, {pipeline_mode = #tpu.pipeline_mode<synchronous>, transform_indices = @transform_1, window_bounds = array<i64: 32, 64>}, {pipeline_mode = #tpu.pipeline_mode<synchronous>, transform_indices = @transform_2, window_bounds = array<i64: 1, 64>}, {transform_indices = @transform_3, window_bounds = array<i64: 16, 64>}]} {
    %c0 = arith.constant 0 : index
    %c0_0 = arith.constant 0 : index
    %0 = vector.load %arg1[%c0, %c0_0] : memref<16x32xbf16, #tpu.memory_space<vmem>>, vector<16x32xbf16>
    %c0_1 = arith.constant 0 : index
    %c0_2 = arith.constant 0 : index
    %1 = vector.load %arg2[%c0_1, %c0_2] : memref<32x64xbf16, #tpu.memory_space<vmem>>, vector<32x64xbf16>
    %cst = arith.constant dense<0.000000e+00> : vector<16x64xf32>
    %2 = tpu.matmul %0, %1, %cst {dimension_numbers = #tpu.dot_dimension_numbers<[1], [0], [0], [1], [0, 0, 1, 1], [], []>} : vector<16x32xbf16>, vector<32x64xbf16>, vector<16x64xf32> -> vector<16x64xf32>
    %c0_3 = arith.constant 0 : index
    %c0_4 = arith.constant 0 : index
    %3 = vector.load %arg3[%c0_3, %c0_4] : memref<1x64xf32, #tpu.memory_space<vmem>>, vector<1x64xf32>
    %4 = vector.broadcast %3 : vector<1x64xf32> to vector<16x64xf32>
    %5 = arith.addf %2, %4 : vector<16x64xf32>
    %cst_5 = arith.constant 4.471500e-02 : f32
    %6 = vector.broadcast %cst_5 : f32 to vector<16x64xf32>
    %7 = arith.mulf %6, %5 : vector<16x64xf32>
    %8 = arith.mulf %7, %5 : vector<16x64xf32>
    %9 = arith.mulf %8, %5 : vector<16x64xf32>
    %10 = arith.addf %5, %9 : vector<16x64xf32>
    %cst_6 = arith.constant 0.797884583 : f32
    %11 = vector.broadcast %cst_6 : f32 to vector<16x64xf32>
    %12 = arith.mulf %11, %10 : vector<16x64xf32>
    %13 = math.tanh %12 : vector<16x64xf32>
    %cst_7 = arith.constant 5.000000e-01 : f32
    %14 = vector.broadcast %cst_7 : f32 to vector<16x64xf32>
    %15 = arith.mulf %14, %5 : vector<16x64xf32>
    %cst_8 = arith.constant 1.000000e+00 : f32
    %16 = vector.broadcast %cst_8 : f32 to vector<16x64xf32>
    %17 = arith.addf %16, %13 : vector<16x64xf32>
    %18 = arith.mulf %15, %17 : vector<16x64xf32>
    %19 = arith.truncf %18 : vector<16x64xf32> to vector<16x64xbf16>
    %c0_9 = arith.constant 0 : index
    %c0_10 = arith.constant 0 : index
    %20 = vector.load %arg4[%c0_9, %c0_10] : memref<16x64xbf16, #tpu.memory_space<vmem>>, vector<16x64xbf16>
    tpu.vector_store %arg4[%c0_9, %c0_10], %19 {strides = array<i32>} : memref<16x64xbf16, #tpu.memory_space<vmem>>, vector<16x64xbf16>,
    return
  }
  func.func @transform_0(%arg0: i32) -> (i32, i32) {
    %c0_i32 = arith.constant 0 : i32
    %c0_i32_0 = arith.constant 0 : i32
    return %arg0, %c0_i32 : i32, i32
  }
  func.func @transform_1(%arg0: i32) -> (i32, i32) {
    %c0_i32 = arith.constant 0 : i32
    %c0_i32_0 = arith.constant 0 : i32
    %c0_i32_1 = arith.constant 0 : i32
    return %c0_i32, %c0_i32_0 : i32, i32
  }
  func.func @transform_2(%arg0: i32) -> (i32, i32) {
    %c0_i32 = arith.constant 0 : i32
    %c0_i32_0 = arith.constant 0 : i32
    %c0_i32_1 = arith.constant 0 : i32
    return %c0_i32, %c0_i32_0 : i32, i32
  }
  func.func @transform_3(%arg0: i32) -> (i32, i32) {
    %c0_i32 = arith.constant 0 : i32
    %c0_i32_0 = arith.constant 0 : i32
    return %arg0, %c0_i32 : i32, i32
  }
}

module attributes {stable_mosaic.version = 11 : i64} {
  func.func @_dense_residual_ln_kernel(%arg0: i32, %arg1: memref<16x64xbf16, #tpu.memory_space<vmem>>, %arg2: memref<64x32xbf16, #tpu.memory_space<vmem>>, %arg3: memref<1x32xf32, #tpu.memory_space<vmem>>, %arg4: memref<16x32xf32, #tpu.memory_space<vmem>>, %arg5: memref<1x32xf32, #tpu.memory_space<vmem>>, %arg6: memref<1x32xf32, #tpu.memory_space<vmem>>, %arg7: memref<16x32xf32, #tpu.memory_space<vmem>>, %arg8: memref<16x32xf32, #tpu.memory_space<vmem>>) attributes {dimension_semantics = [#tpu.dimension_semantics<parallel>], iteration_bounds = array<i64: 1>, scalar_prefetch = 0 : i64, scratch_operands = 0 : i64, tpu.core_type = #tpu.core_type<tc>, window_params = [{transform_indices = @transform_0, window_bounds = array<i64: 16, 64>}, {pipeline_mode = #tpu.pipeline_mode<synchronous>, transform_indices = @transform_1, window_bounds = array<i64: 64, 32>}, {pipeline_mode = #tpu.pipeline_mode<synchronous>, transform_indices = @transform_2, window_bounds = array<i64: 1, 32>}, {transform_indices = @transform_3, window_bounds = array<i64: 16, 32>}, {pipeline_mode = #tpu.pipeline_mode<synchronous>, transform_indices = @transform_4, window_bounds = array<i64: 1, 32>}, {pipeline_mode = #tpu.pipeline_mode<synchronous>, transform_indices = @transform_5, window_bounds = array<i64: 1, 32>}, {transform_indices = @transform_6, window_bounds = array<i64: 16, 32>}, {transform_indices = @transform_7, window_bounds = array<i64: 16, 32>}]} {
    %c0 = arith.constant 0 : index
    %c0_0 = arith.constant 0 : index
    %0 = vector.load %arg1[%c0, %c0_0] : memref<16x64xbf16, #tpu.memory_space<vmem>>, vector<16x64xbf16>
    %c0_1 = arith.constant 0 : index
    %c0_2 = arith.constant 0 : index
    %1 = vector.load %arg2[%c0_1, %c0_2] : memref<64x32xbf16, #tpu.memory_space<vmem>>, vector<64x32xbf16>
    %cst = arith.constant dense<0.000000e+00> : vector<16x32xf32>
    %2 = tpu.matmul %0, %1, %cst {dimension_numbers = #tpu.dot_dimension_numbers<[1], [0], [0], [1], [0, 0, 1, 1], [], []>} : vector<16x64xbf16>, vector<64x32xbf16>, vector<16x32xf32> -> vector<16x32xf32>
    %c0_3 = arith.constant 0 : index
    %c0_4 = arith.constant 0 : index
    %3 = vector.load %arg3[%c0_3, %c0_4] : memref<1x32xf32, #tpu.memory_space<vmem>>, vector<1x32xf32>
    %4 = vector.broadcast %3 : vector<1x32xf32> to vector<16x32xf32>
    %5 = arith.addf %2, %4 : vector<16x32xf32>
    %c0_5 = arith.constant 0 : index
    %c0_6 = arith.constant 0 : index
    %6 = vector.load %arg7[%c0_5, %c0_6] : memref<16x32xf32, #tpu.memory_space<vmem>>, vector<16x32xf32>
    tpu.vector_store %arg7[%c0_5, %c0_6], %5 {strides = array<i32>} : memref<16x32xf32, #tpu.memory_space<vmem>>, vector<16x32xf32>,
    %c0_7 = arith.constant 0 : index
    %c0_8 = arith.constant 0 : index
    %7 = vector.load %arg4[%c0_7, %c0_8] : memref<16x32xf32, #tpu.memory_space<vmem>>, vector<16x32xf32>
    %8 = arith.addf %5, %7 : vector<16x32xf32>
    %cst_9 = arith.constant dense<0.000000e+00> : vector<16xf32>
    %9 = vector.multi_reduction <add>, %8, %cst_9 [1] : vector<16x32xf32> to vector<16xf32>
    %10 = vector.shape_cast %9 : vector<16xf32> to vector<16x1xf32>
    %cst_10 = arith.constant 3.200000e+01 : f32
    %11 = vector.broadcast %cst_10 : f32 to vector<16x1xf32>
    %12 = arith.divf %10, %11 : vector<16x1xf32>
    %13 = vector.broadcast %12 : vector<16x1xf32> to vector<16x32xf32>
    %14 = arith.subf %8, %13 : vector<16x32xf32>
    %15 = arith.mulf %14, %14 : vector<16x32xf32>
    %cst_11 = arith.constant dense<0.000000e+00> : vector<16xf32>
    %16 = vector.multi_reduction <add>, %15, %cst_11 [1] : vector<16x32xf32> to vector<16xf32>
    %17 = vector.shape_cast %16 : vector<16xf32> to vector<16x1xf32>
    %cst_12 = arith.constant 3.200000e+01 : f32
    %18 = vector.broadcast %cst_12 : f32 to vector<16x1xf32>
    %19 = arith.divf %17, %18 : vector<16x1xf32>
    %20 = vector.broadcast %12 : vector<16x1xf32> to vector<16x32xf32>
    %21 = arith.subf %8, %20 : vector<16x32xf32>
    %cst_13 = arith.constant 9.99999996E-13 : f32
    %22 = vector.broadcast %cst_13 : f32 to vector<16x1xf32>
    %23 = arith.addf %19, %22 : vector<16x1xf32>
    %24 = math.rsqrt %23 : vector<16x1xf32>
    %25 = vector.broadcast %24 : vector<16x1xf32> to vector<16x32xf32>
    %26 = arith.mulf %21, %25 : vector<16x32xf32>
    %c0_14 = arith.constant 0 : index
    %c0_15 = arith.constant 0 : index
    %27 = vector.load %arg5[%c0_14, %c0_15] : memref<1x32xf32, #tpu.memory_space<vmem>>, vector<1x32xf32>
    %28 = vector.broadcast %27 : vector<1x32xf32> to vector<16x32xf32>
    %29 = arith.mulf %26, %28 : vector<16x32xf32>
    %c0_16 = arith.constant 0 : index
    %c0_17 = arith.constant 0 : index
    %30 = vector.load %arg6[%c0_16, %c0_17] : memref<1x32xf32, #tpu.memory_space<vmem>>, vector<1x32xf32>
    %31 = vector.broadcast %30 : vector<1x32xf32> to vector<16x32xf32>
    %32 = arith.addf %29, %31 : vector<16x32xf32>
    %c0_18 = arith.constant 0 : index
    %c0_19 = arith.constant 0 : index
    %33 = vector.load %arg8[%c0_18, %c0_19] : memref<16x32xf32, #tpu.memory_space<vmem>>, vector<16x32xf32>
    tpu.vector_store %arg8[%c0_18, %c0_19], %32 {strides = array<i32>} : memref<16x32xf32, #tpu.memory_space<vmem>>, vector<16x32xf32>,
    return
  }
  func.func @transform_0(%arg0: i32) -> (i32, i32) {
    %c0_i32 = arith.constant 0 : i32
    %c0_i32_0 = arith.constant 0 : i32
    return %arg0, %c0_i32 : i32, i32
  }
  func.func @transform_1(%arg0: i32) -> (i32, i32) {
    %c0_i32 = arith.constant 0 : i32
    %c0_i32_0 = arith.constant 0 : i32
    %c0_i32_1 = arith.constant 0 : i32
    return %c0_i32, %c0_i32_0 : i32, i32
  }
  func.func @transform_2(%arg0: i32) -> (i32, i32) {
    %c0_i32 = arith.constant 0 : i32
    %c0_i32_0 = arith.constant 0 : i32
    %c0_i32_1 = arith.constant 0 : i32
    return %c0_i32, %c0_i32_0 : i32, i32
  }
  func.func @transform_3(%arg0: i32) -> (i32, i32) {
    %c0_i32 = arith.constant 0 : i32
    %c0_i32_0 = arith.constant 0 : i32
    return %arg0, %c0_i32 : i32, i32
  }
  func.func @transform_4(%arg0: i32) -> (i32, i32) {
    %c0_i32 = arith.constant 0 : i32
    %c0_i32_0 = arith.constant 0 : i32
    %c0_i32_1 = arith.constant 0 : i32
    return %c0_i32, %c0_i32_0 : i32, i32
  }
  func.func @transform_5(%arg0: i32) -> (i32, i32) {
    %c0_i32 = arith.constant 0 : i32
    %c0_i32_0 = arith.constant 0 : i32
    %c0_i32_1 = arith.constant 0 : i32
    return %c0_i32, %c0_i32_0 : i32, i32
  }
  func.func @transform_6(%arg0: i32) -> (i32, i32) {
    %c0_i32 = arith.constant 0 : i32
    %c0_i32_0 = arith.constant 0 : i32
    return %arg0, %c0_i32 : i32, i32
  }
  func.func @transform_7(%arg0: i32) -> (i32, i32) {
    %c0_i32 = arith.constant 0 : i32
    %c0_i32_0 = arith.constant 0 : i32
    return %arg0, %c0_i32 : i32, i32
  }
}

</mosaic_0001>

<llo_original>
// kernel: bert_layer_forward.5
$region0: #{bert_layer_forward.5}
  #allocation0 [shape = 'u32[]', space=smem, size = 0x4, offset = 0x4, fixed_abs, tag = 'smem constant byte address 0x4 - core index']
  #allocation1 [shape = 'u32[72,128]{1,0:T(1,128)}', space=vmem, size = 0x9000, scoped, tag = 'internal scratch']
  %s0 = inlined_call_operand.hbm [shape: f32[16,32], index: 0, kind: input, shape index: {}]
  %s1 = inlined_call_operand.hbm [shape: bf16[32,96], index: 1, kind: input, shape index: {}]
  %s2 = inlined_call_operand.vmem [shape: f32[1,96], index: 2, kind: input, shape index: {}]
  %s3 = inlined_call_operand.vmem [shape: bf16[16,32], index: 3, kind: output, shape index: {0}]
  %s4 = inlined_call_operand.vmem [shape: bf16[16,32], index: 4, kind: output, shape index: {1}]
  %s5 = inlined_call_operand.vmem [shape: bf16[16,32], index: 5, kind: output, shape index: {2}]
  %6 = xla_tuple %s3, %s4, %s5
  %s7 = sld [smem:[#allocation0]]
  $region46: #{bert_layer_forward.5} parent=0
    _
  %s9 = ssub.s32 1, %s7
  %s10 = scalar_select 0, %s9, %s7
  $region1: #{bert_layer_forward.5} parent=0
    #allocation2 [shape = 'u8[8192]{0}', space=vmem, size = 0x2000, scoped, tag = 'input window, operand 0, single buffered']
    #allocation3 [shape = 's32[1]{0}', space=sflag, size = 0x4, scoped, tag = 'scoped memory for bert_layer_forward.5']
    #allocation4 [shape = 'u8[8192]{0}', space=vmem, size = 0x2000, scoped, tag = 'input window, operand 1, single buffered']
    #allocation5 [shape = 's32[1]{0}', space=sflag, size = 0x4, scoped, tag = 'scoped memory for bert_layer_forward.5']
    %11 = vsyncpa [#allocation3], 0
    %12 = vsyncpa [#allocation5], 0
    // Predicated region
    $region2: #{bert_layer_forward.5} parent=1 // pred_check
      _
    $region3: #{bert_layer_forward.5} parent=1 // pred_check_branch
      %14 = sbr.rel (0) target = $region5
    $region4: #{bert_layer_forward.5} parent=1 // pred_region
      %16 = vsyncadd [#allocation3], 0
      %s17 = sshll.u32 %s0, 4
      %s18 = int_to_ptr.hbm [resolvable:$true] %s17
      %s19 = sshll.u32 [#allocation2], 4
      %s20 = int_to_ptr.vmem [resolvable:$true] %s19
      %25 = dma.hbm_to_vmem [thread:$0]  %s18, 256, %s20, [#allocation3], 128, 128, 8
    $region5: #{bert_layer_forward.5} parent=1 // pred_fallthru
      _
    // Predicated region
    $region6: #{bert_layer_forward.5} parent=1 // pred_check
      _
    $region7: #{bert_layer_forward.5} parent=1 // pred_check_branch
      %27 = sbr.rel (0) target = $region9
    $region8: #{bert_layer_forward.5} parent=1 // pred_region
      %29 = vsyncadd [#allocation5], 0
      %s30 = sshll.u32 %s1, 4
      %s31 = int_to_ptr.hbm [resolvable:$true] %s30
      %s32 = sshll.u32 [#allocation4], 4
      %s33 = int_to_ptr.vmem [resolvable:$true] %s32
      %38 = dma.hbm_to_vmem [thread:$0]  %s31, 256, %s33, [#allocation5], 64, 64, 4
    $region9: #{bert_layer_forward.5} parent=1 // pred_fallthru
      _
    // Predicated region
    $region10: #{bert_layer_forward.5} parent=1 // pred_check
      _
    $region11: #{bert_layer_forward.5} parent=1 // pred_check_branch
      %40 = sbr.rel (0) target = $region13
    $region12: #{bert_layer_forward.5} parent=1 // pred_region
      _
    $region13: #{bert_layer_forward.5} parent=1 // pred_fallthru
      _
    // Predicated region
    $region14: #{bert_layer_forward.5} parent=1 // pred_check
      _
    $region15: #{bert_layer_forward.5} parent=1 // pred_check_branch
      %42 = sbr.rel (0) target = $region17
    $region16: #{bert_layer_forward.5} parent=1 // pred_region
      %44 = dma.done [#allocation3], 256
    $region17: #{bert_layer_forward.5} parent=1 // pred_fallthru
      _
    // Predicated region
    $region18: #{bert_layer_forward.5} parent=1 // pred_check
      _
    $region19: #{bert_layer_forward.5} parent=1 // pred_check_branch
      %46 = sbr.rel (0) target = $region21
    $region20: #{bert_layer_forward.5} parent=1 // pred_region
      %48 = dma.done [#allocation5], 256
    $region21: #{bert_layer_forward.5} parent=1 // pred_fallthru
      _
    %v50 = vld [vmem:[#allocation2] sm:$0xff]
    %v51 = vld [vmem:[#allocation2 + $0x8] sm:$0xff]
    %v52 = vpack.c.bf16 %v51, %v50
    %v53 = vld [vmem:[#allocation4] sm:$0xf]
    %v54 = vld [vmem:[#allocation4 + $0x4] sm:$0xf]
    %v55 = vld [vmem:[#allocation4 + $0x8] sm:$0xf]
    %v56 = vld [vmem:[#allocation4 + $0xc] sm:$0xf]
    %v57 = vld [vmem:[%s2] sm:$0x1]
    %v59 = vperm.slane %v57, 0
    %v65 = vunpack.c.l.b16 %v53
    %v66 = vunpack.c.l.b16 %v54
    %v67 = vunpack.c.l.b16 %v55
    %v68 = vunpack.c.l.b16 %v56
    %v69 = vpack.c.b16 %v66, %v65
    %v70 = vpack.c.b16 %v68, %v67
    %vm73 = vcmask 261120
    %v75 = vsel %vm73, %v52, 0
    %77 = vmatpush.bf16.msra.mxu0 0
    %78 = vmatpush.bf16.msra.mxu0 0
    %79 = vmatpush.bf16.msra.mxu0 0
    %80 = vmatpush.bf16.msra.mxu0 0
    %81 = vmatpush.bf16.msra.mxu0 0
    %82 = vmatpush.bf16.msra.mxu0 0
    %83 = vmatpush.bf16.msra.mxu0 %v70
    %84 = vmatpush.bf16.msra.mxu0 %v69
    %85 = vmatmul.bf16.gmra.mxu0 %v75
    %v86 = vpop.f32.mrf.mxu0
    %v87 = vadd.f32 %v59, %v86
    %v88 = vpop.f32.mrf.mxu0
    %v89 = vadd.f32 %v59, %v88
    %90 = vdwg.mxu0
    %v91 = vpack.c.bf16 %v87, %v87
    %v92 = vpack.c.bf16 %v89, %v89
    %vm93 = vcmask 257024
    %94 = vst.msk [vmem:[%s3] sm:$0xf] %vm93, %v91
    %95 = vst.msk [vmem:[%s3 + $0x4] sm:$0xf] %vm93, %v92
    %98 = vrot.lane.b32.xlu0 %v91, 96
    %v99 = vpop.permute.xlu0 %98
    %100 = vrot.lane.b32.xlu0 %v92, 96
    %v101 = vpop.permute.xlu0 %100
    %104 = vst.msk [vmem:[%s4] sm:$0xf] %vm93, %v99
    %105 = vst.msk [vmem:[%s4 + $0x4] sm:$0xf] %vm93, %v101
    %106 = vrot.lane.b32.xlu0 %v91, 64
    %v107 = vpop.permute.xlu0 %106
    %108 = vrot.lane.b32.xlu0 %v92, 64
    %v109 = vpop.permute.xlu0 %108
    %112 = vst.msk [vmem:[%s5] sm:$0xf] %vm93, %v107
    %113 = vst.msk [vmem:[%s5 + $0x4] sm:$0xf] %vm93, %v109
    // Predicated region
    $region22: #{bert_layer_forward.5} parent=1 // pred_check
      _
    $region23: #{bert_layer_forward.5} parent=1 // pred_check_branch
      %115 = sbr.rel (0) target = $region25
    $region24: #{bert_layer_forward.5} parent=1 // pred_region
      _
    $region25: #{bert_layer_forward.5} parent=1 // pred_fallthru
      _
    // Predicated region
    $region26: #{bert_layer_forward.5} parent=1 // pred_check
      _
    $region27: #{bert_layer_forward.5} parent=1 // pred_check_branch
      %117 = sbr.rel (0) target = $region29
    $region28: #{bert_layer_forward.5} parent=1 // pred_region
      _
    $region29: #{bert_layer_forward.5} parent=1 // pred_fallthru
      _
    // Predicated region
    $region30: #{bert_layer_forward.5} parent=1 // pred_check
      _
    $region31: #{bert_layer_forward.5} parent=1 // pred_check_branch
      %119 = sbr.rel (0) target = $region33
    $region32: #{bert_layer_forward.5} parent=1 // pred_region
      _
    $region33: #{bert_layer_forward.5} parent=1 // pred_fallthru
      _
    // Predicated region
    $region34: #{bert_layer_forward.5} parent=1 // pred_check
      _
    $region35: #{bert_layer_forward.5} parent=1 // pred_check_branch
      %121 = sbr.rel (0) target = $region37
    $region36: #{bert_layer_forward.5} parent=1 // pred_region
      _
    $region37: #{bert_layer_forward.5} parent=1 // pred_fallthru
      _
    // Predicated region
    $region38: #{bert_layer_forward.5} parent=1 // pred_check
      _
    $region39: #{bert_layer_forward.5} parent=1 // pred_check_branch
      %123 = sbr.rel (0) target = $region41
    $region40: #{bert_layer_forward.5} parent=1 // pred_region
      _
    $region41: #{bert_layer_forward.5} parent=1 // pred_fallthru
      _
    // Predicated region
    $region42: #{bert_layer_forward.5} parent=1 // pred_check
      _
    $region43: #{bert_layer_forward.5} parent=1 // pred_check_branch
      %125 = sbr.rel (0) target = $region45
    $region44: #{bert_layer_forward.5} parent=1 // pred_region
      _
    $region45: #{bert_layer_forward.5} parent=1 // pred_fallthru
      _
    %126 = vsyncpa [#allocation3], 1
    %127 = vsyncpa [#allocation5], 1

// kernel: bert_layer_forward.7
$region0: #{bert_layer_forward.7}
  #allocation0 [shape = 'u32[]', space=smem, size = 0x4, offset = 0x4, fixed_abs, tag = 'smem constant byte address 0x4 - core index']
  #allocation1 [shape = 'u32[72,128]{1,0:T(1,128)}', space=vmem, size = 0x9000, scoped, tag = 'internal scratch']
  %s0 = inlined_call_operand.vmem [shape: bf16[16,32], index: 0, kind: input, shape index: {}]
  %s1 = inlined_call_operand.vmem [shape: bf16[32,32], index: 1, kind: input, shape index: {}]
  %s2 = inlined_call_operand.vmem [shape: f32[1,32], index: 2, kind: input, shape index: {}]
  %s3 = inlined_call_operand.vmem [shape: f32[16,32], index: 3, kind: input, shape index: {}]
  %s4 = inlined_call_operand.vmem [shape: f32[1,32], index: 4, kind: input, shape index: {}]
  %s5 = inlined_call_operand.vmem [shape: f32[1,32], index: 5, kind: input, shape index: {}]
  %s6 = inlined_call_operand.hbm [shape: f32[16,32], index: 6, kind: output, shape index: {0}]
  %s7 = inlined_call_operand.vmem [shape: f32[16,32], index: 7, kind: output, shape index: {1}]
  %s8 = inlined_call_operand.vmem [shape: bf16[16,32], index: 8, kind: output, shape index: {2}]
  %9 = xla_tuple %s6, %s7, %s8
  %s10 = sld [smem:[#allocation0]]
  $region50: #{bert_layer_forward.7} parent=0
    _
  %s12 = ssub.s32 1, %s10
  %s13 = scalar_select 0, %s12, %s10
  $region1: #{bert_layer_forward.7} parent=0
    #allocation2 [shape = 'u8[8192]{0}', space=vmem, size = 0x2000, scoped, tag = 'output window, operand 0, single buffered']
    #allocation3 [shape = 's32[1]{0}', space=sflag, size = 0x4, scoped, tag = 'scoped memory for bert_layer_forward.7']
    %14 = vsyncpa [#allocation3], 0
    // Predicated region
    $region2: #{bert_layer_forward.7} parent=1 // pred_check
      _
    $region3: #{bert_layer_forward.7} parent=1 // pred_check_branch
      %16 = sbr.rel (0) target = $region5
    $region4: #{bert_layer_forward.7} parent=1 // pred_region
      _
    $region5: #{bert_layer_forward.7} parent=1 // pred_fallthru
      _
    // Predicated region
    $region6: #{bert_layer_forward.7} parent=1 // pred_check
      _
    $region7: #{bert_layer_forward.7} parent=1 // pred_check_branch
      %18 = sbr.rel (0) target = $region9
    $region8: #{bert_layer_forward.7} parent=1 // pred_region
      _
    $region9: #{bert_layer_forward.7} parent=1 // pred_fallthru
      _
    // Predicated region
    $region10: #{bert_layer_forward.7} parent=1 // pred_check
      _
    $region11: #{bert_layer_forward.7} parent=1 // pred_check_branch
      %20 = sbr.rel (0) target = $region13
    $region12: #{bert_layer_forward.7} parent=1 // pred_region
      _
    $region13: #{bert_layer_forward.7} parent=1 // pred_fallthru
      _
    // Predicated region
    $region14: #{bert_layer_forward.7} parent=1 // pred_check
      _
    $region15: #{bert_layer_forward.7} parent=1 // pred_check_branch
      %22 = sbr.rel (0) target = $region17
    $region16: #{bert_layer_forward.7} parent=1 // pred_region
      _
    $region17: #{bert_layer_forward.7} parent=1 // pred_fallthru
      _
    // Predicated region
    $region18: #{bert_layer_forward.7} parent=1 // pred_check
      _
    $region19: #{bert_layer_forward.7} parent=1 // pred_check_branch
      %24 = sbr.rel (0) target = $region21
    $region20: #{bert_layer_forward.7} parent=1 // pred_region
      _
    $region21: #{bert_layer_forward.7} parent=1 // pred_fallthru
      _
    // Predicated region
    $region22: #{bert_layer_forward.7} parent=1 // pred_check
      _
    $region23: #{bert_layer_forward.7} parent=1 // pred_check_branch
      %26 = sbr.rel (0) target = $region25
    $region24: #{bert_layer_forward.7} parent=1 // pred_region
      _
    $region25: #{bert_layer_forward.7} parent=1 // pred_fallthru
      _
    %v28 = vld [vmem:[%s0] sm:$0xf]
    %v29 = vld [vmem:[%s0 + $0x4] sm:$0xf]
    %v30 = vld [vmem:[%s1] sm:$0xf]
    %v31 = vld [vmem:[%s1 + $0x4] sm:$0xf]
    %v32 = vld [vmem:[%s1 + $0x8] sm:$0xf]
    %v33 = vld [vmem:[%s1 + $0xc] sm:$0xf]
    %v34 = vld [vmem:[%s2] sm:$0x1]
    %v36 = vperm.slane %v34, 0
    %v40 = vunpack.c.l.b16 %v28
    %v41 = vunpack.c.l.b16 %v29
    %v42 = vpack.c.b16 %v41, %v40
    %v47 = vunpack.c.l.b16 %v30
    %v48 = vunpack.c.l.b16 %v31
    %v49 = vunpack.c.l.b16 %v32
    %v50 = vunpack.c.l.b16 %v33
    %v51 = vpack.c.b16 %v48, %v47
    %v52 = vpack.c.b16 %v50, %v49
    %vm55 = vcmask 261120
    %v57 = vsel %vm55, %v42, 0
    %59 = vmatpush.bf16.msra.mxu0 0
    %60 = vmatpush.bf16.msra.mxu0 0
    %61 = vmatpush.bf16.msra.mxu0 0
    %62 = vmatpush.bf16.msra.mxu0 0
    %63 = vmatpush.bf16.msra.mxu0 0
    %64 = vmatpush.bf16.msra.mxu0 0
    %65 = vmatpush.bf16.msra.mxu0 %v52
    %66 = vmatpush.bf16.msra.mxu0 %v51
    %67 = vmatmul.bf16.gmra.mxu0 %v57
    %v68 = vpop.f32.mrf.mxu0
    %v69 = vadd.f32 %v36, %v68
    %v70 = vpop.f32.mrf.mxu0
    %v71 = vadd.f32 %v36, %v70
    %72 = vdwg.mxu0
    %73 = vst.msk [vmem:[#allocation2] sm:$0xff] %vm55, %v69
    %74 = vst.msk [vmem:[#allocation2 + $0x8] sm:$0xff] %vm55, %v71
    %v75 = vld [vmem:[%s3] sm:$0xff]
    %v76 = vld [vmem:[%s3 + $0x8] sm:$0xff]
    %v77 = vadd.f32 %v69, %v75
    %v78 = vadd.f32 %v71, %v76
    %v79 = vsel %vm55, %v77, 0.0
    %80 = vadd.xlane.f32.xlu0 %v79
    %v81 = vpop.xlane.xlu0 %80
    %v82 = vsel %vm55, %v78, 0.0
    %83 = vadd.xlane.f32.xlu0 %v82
    %v84 = vpop.xlane.xlu0 %83
    %v85 = vrcp.pop 32.0
    %v86 = vmul.f32 32.0, %v85
    %v87 = vsub.f32 1.0, %v86
    %v88 = vmul.f32 %v85, %v87
    %v89 = vadd.f32 %v85, %v88
    %vm90 = vweird.f32 %v85
    %v91 = vsel %vm90, %v85, %v89
    %v92 = vmul.f32 %v81, %v91
    %v93 = vmul.f32 %v84, %v91
    %v94 = vsub.f32 %v77, %v92
    %v95 = vsub.f32 %v78, %v93
    %v96 = vmul.f32 %v94, %v94
    %v97 = vmul.f32 %v95, %v95
    %v98 = vsel %vm55, %v96, 0.0
    %99 = vadd.xlane.f32.xlu0 %v98
    %v100 = vpop.xlane.xlu0 %99
    %v101 = vsel %vm55, %v97, 0.0
    %102 = vadd.xlane.f32.xlu0 %v101
    %v103 = vpop.xlane.xlu0 %102
    %v104 = vmul.f32 %v100, %v91
    %v105 = vmul.f32 %v103, %v91
    %v106 = vadd.f32 %v104, 1e-12
    %v107 = vadd.f32 %v105, 1e-12
    %v108 = vrsqrt.pop %v106
    %v109 = vmul.f32 %v108, %v106
    %v110 = vmul.f32 %v109, %v108
    %v111 = vmul.f32 0.5, %v110
    %v112 = vsub.f32 1.5, %v111
    %v113 = vmul.f32 %v108, %v112
    %vm114 = vweird.f32 %v106
    %vm115 = vweird.f32 %v108
    %vm116 = vmor %vm114, %vm115
    %v117 = vsel %vm116, %v108, %v113
    %v118 = vrsqrt.pop %v107
    %v119 = vmul.f32 %v118, %v107
    %v120 = vmul.f32 %v119, %v118
    %v121 = vmul.f32 0.5, %v120
    %v122 = vsub.f32 1.5, %v121
    %v123 = vmul.f32 %v118, %v122
    %vm124 = vweird.f32 %v107
    %vm125 = vweird.f32 %v118
    %vm126 = vmor %vm124, %vm125
    %v127 = vsel %vm126, %v118, %v123
    %v128 = vmul.f32 %v94, %v117
    %v129 = vmul.f32 %v95, %v127
    %v130 = vld [vmem:[%s4] sm:$0x1]
    %v132 = vperm.slane %v130, 0
    %v134 = vmul.f32 %v128, %v132
    %v135 = vmul.f32 %v129, %v132
    %v136 = vld [vmem:[%s5] sm:$0x1]
    %v138 = vperm.slane %v136, 0
    %v140 = vadd.f32 %v134, %v138
    %v141 = vadd.f32 %v135, %v138
    %142 = vst.msk [vmem:[%s7] sm:$0xff] %vm55, %v140
    %143 = vst.msk [vmem:[%s7 + $0x8] sm:$0xff] %vm55, %v141
    %v144 = vpack.c.bf16 %v140, %v140
    %v145 = vpack.c.bf16 %v141, %v141
    %vm146 = vcmask 257024
    %147 = vst.msk [vmem:[%s8] sm:$0xf] %vm146, %v144
    %148 = vst.msk [vmem:[%s8 + $0x4] sm:$0xf] %vm146, %v145
    // Predicated region
    $region26: #{bert_layer_forward.7} parent=1 // pred_check
      _
    $region27: #{bert_layer_forward.7} parent=1 // pred_check_branch
      %150 = sbr.rel (0) target = $region29
    $region28: #{bert_layer_forward.7} parent=1 // pred_region
      %152 = vsyncadd [#allocation3], 0
      %s153 = sshll.u32 [#allocation2], 4
      %s154 = int_to_ptr.vmem [resolvable:$true] %s153
      %s155 = sshll.u32 %s6, 4
      %s156 = int_to_ptr.hbm [resolvable:$true] %s155
      %161 = dma.vmem_to_hbm [thread:$0]  %s154, 256, %s156, [#allocation3], 128, 128, 8
    $region29: #{bert_layer_forward.7} parent=1 // pred_fallthru
      _
    // Predicated region
    $region30: #{bert_layer_forward.7} parent=1 // pred_check
      _
    $region31: #{bert_layer_forward.7} parent=1 // pred_check_branch
      %163 = sbr.rel (0) target = $region33
    $region32: #{bert_layer_forward.7} parent=1 // pred_region
      _
    $region33: #{bert_layer_forward.7} parent=1 // pred_fallthru
      _
    // Predicated region
    $region34: #{bert_layer_forward.7} parent=1 // pred_check
      _
    $region35: #{bert_layer_forward.7} parent=1 // pred_check_branch
      %165 = sbr.rel (0) target = $region37
    $region36: #{bert_layer_forward.7} parent=1 // pred_region
      _
    $region37: #{bert_layer_forward.7} parent=1 // pred_fallthru
      _
    // Predicated region
    $region38: #{bert_layer_forward.7} parent=1 // pred_check
      _
    $region39: #{bert_layer_forward.7} parent=1 // pred_check_branch
      %167 = sbr.rel (0) target = $region41
    $region40: #{bert_layer_forward.7} parent=1 // pred_region
      %169 = dma.done [#allocation3], 256
    $region41: #{bert_layer_forward.7} parent=1 // pred_fallthru
      _
    // Predicated region
    $region42: #{bert_layer_forward.7} parent=1 // pred_check
      _
    $region43: #{bert_layer_forward.7} parent=1 // pred_check_branch
      %171 = sbr.rel (0) target = $region45
    $region44: #{bert_layer_forward.7} parent=1 // pred_region
      _
    $region45: #{bert_layer_forward.7} parent=1 // pred_fallthru
      _
    // Predicated region
    $region46: #{bert_layer_forward.7} parent=1 // pred_check
      _
    $region47: #{bert_layer_forward.7} parent=1 // pred_check_branch
      %173 = sbr.rel (0) target = $region49
    $region48: #{bert_layer_forward.7} parent=1 // pred_region
      _
    $region49: #{bert_layer_forward.7} parent=1 // pred_fallthru
      _
    %174 = vsyncpa [#allocation3], 1

// kernel: bert_layer_forward.6
$region0: #{bert_layer_forward.6}
  #allocation0 [shape = 'u32[]', space=smem, size = 0x4, offset = 0x4, fixed_abs, tag = 'smem constant byte address 0x4 - core index']
  #allocation1 [shape = 'u32[72,128]{1,0:T(1,128)}', space=vmem, size = 0x9000, scoped, tag = 'internal scratch']
  #allocation2 [shape = 'f32[2,8]{1,0:T(2,128)}', space=vmem, size = 0x400, scoped, tag = 'scratch operand']
  #allocation3 [shape = 'f32[2,8]{1,0:T(2,128)}', space=vmem, size = 0x400, scoped, tag = 'scratch operand']
  #allocation4 [shape = 'f32[2,8,16]{2,1,0:T(8,128)}', space=vmem, size = 0x2000, scoped, tag = 'scratch operand']
  %s0 = inlined_call_operand.vmem [shape: bf16[2,2,8,16], index: 0, kind: input, shape index: {}]
  %s1 = inlined_call_operand.vmem [shape: bf16[2,2,8,16], index: 1, kind: input, shape index: {}]
  %s2 = inlined_call_operand.vmem [shape: bf16[2,2,8,16], index: 2, kind: input, shape index: {}]
  %s3 = inlined_call_operand.vmem [shape: bf16[2,8,32], index: 3, kind: output, shape index: {}]
  %s4 = sld [smem:[#allocation0]]
  $region53: #{bert_layer_forward.6} parent=0
    _
  %s6 = ssub.s32 1, %s4
  %s7 = scalar_select 0, %s6, %s4
  loop: start=0, step=1, limit=4
  $region2: #{bert_layer_forward.6} parent=0 // loop_pre_header
    _
  $region3: #{bert_layer_forward.6} parent=0 // loop_header
    %s9 = sphi 0, %s13
    %p10 = scmp.ge.s32.totalorder %s9, 4
    %s16 = sphi 0, %s35
    %s17 = sphi 0, %s31
    %s18 = sphi 0, %s27
    %s19 = sphi 0, %s16
    %s20 = sphi 0, %s17
    %s21 = sphi 0, %s18
    %s22 = sphi 0, %s19
    %s23 = sphi 0, %s20
    %s24 = sphi 0, %s21
    %s40 = sphi 0, %s42
    %s43 = sphi 0, %s40
    %s44 = sphi 0, %s43
    %s60 = sphi 0, %s44
    %s68 = sphi 0, %s70
    %s71 = sphi 0, %s68
    %s72 = sphi 0, %s71
    %s88 = sphi 0, %s72
    %s96 = sphi 0, %s98
    %s99 = sphi 0, %s96
    %s100 = sphi 0, %s99
    %s116 = sphi 0, %s100
    %s124 = sphi 0, %s126
    %s127 = sphi 0, %s124
    %s128 = sphi 0, %s127
    %s144 = sphi 0, %s128
  $region4: #{bert_layer_forward.6} parent=0 // loop_header_branch
    %12 = sbr.rel (%p10) target = $region8
  $region5: #{bert_layer_forward.6} parent=0 // loop_body
    %s14 = ssub.s32 %s9, 1
    %s15 = ssub.s32 %s9, 2
    %s25 = sadd.s32 1, %s18
    %p26 = scmp.ge.s32.totalorder %s25, 1
    %s27 = scalar_select %p26, 0, %s25
    %s28 = sadd.s32 1, %s17
    %s29 = scalar_select %p26, %s28, %s17
    %p30 = scmp.ge.s32.totalorder %s29, 1
    %s31 = scalar_select %p30, 0, %s29
    %s32 = sadd.s32 1, %s16
    %s33 = scalar_select %p30, %s32, %s16
    %p34 = scmp.ge.s32.totalorder %s33, 2
    %s35 = scalar_select %p34, 0, %s33
    %s36 = ssub.s32 %s16, %s35
    %s37 = ssub.s32 %s17, %s31
    %s38 = sor.u32 %s36, %s37
    %p39 = scmp.eq.s32.totalorder %s38, 0
    %s41 = sadd.s32 %s40, 1
    %s42 = scalar_select %p39, %s40, %s41
    %p45 = pneg %p39
    %p46 = scmp.eq.s32.totalorder %s9, 1
    %p47 = por %p45, %p46
    %p48 = scmp.ne.s32.totalorder %s40, %s43
    %p49 = scmp.eq.s32.totalorder %s9, 0
    %p50 = por %p48, %p49
    %p51 = scmp.ne.s32.totalorder %s40, %s43
    %p52 = scmp.eq.s32.totalorder %s14, 1
    %p53 = por %p51, %p52
    %p54 = scmp.ne.s32.totalorder %s43, %s44
    %p55 = scmp.eq.s32.totalorder %s14, 0
    %p56 = por %p54, %p55
    %p57 = scmp.ne.s32.totalorder %s43, %s44
    %p58 = scmp.eq.s32.totalorder %s15, 1
    %p59 = por %p57, %p58
    %p61 = scmp.ne.s32.totalorder %s44, %s60
    %p62 = scmp.eq.s32.totalorder %s15, 0
    %p63 = por %p61, %p62
    %s64 = ssub.s32 %s16, %s35
    %s65 = ssub.s32 %s18, %s27
    %s66 = sor.u32 %s64, %s65
    %p67 = scmp.eq.s32.totalorder %s66, 0
    %s69 = sadd.s32 %s68, 1
    %s70 = scalar_select %p67, %s68, %s69
    %p73 = pneg %p67
    %p74 = scmp.eq.s32.totalorder %s9, 1
    %p75 = por %p73, %p74
    %p76 = scmp.ne.s32.totalorder %s68, %s71
    %p77 = scmp.eq.s32.totalorder %s9, 0
    %p78 = por %p76, %p77
    %p79 = scmp.ne.s32.totalorder %s68, %s71
    %p80 = scmp.eq.s32.totalorder %s14, 1
    %p81 = por %p79, %p80
    %p82 = scmp.ne.s32.totalorder %s71, %s72
    %p83 = scmp.eq.s32.totalorder %s14, 0
    %p84 = por %p82, %p83
    %p85 = scmp.ne.s32.totalorder %s71, %s72
    %p86 = scmp.eq.s32.totalorder %s15, 1
    %p87 = por %p85, %p86
    %p89 = scmp.ne.s32.totalorder %s72, %s88
    %p90 = scmp.eq.s32.totalorder %s15, 0
    %p91 = por %p89, %p90
    %s92 = ssub.s32 %s16, %s35
    %s93 = ssub.s32 %s18, %s27
    %s94 = sor.u32 %s92, %s93
    %p95 = scmp.eq.s32.totalorder %s94, 0
    %s97 = sadd.s32 %s96, 1
    %s98 = scalar_select %p95, %s96, %s97
    %p101 = pneg %p95
    %p102 = scmp.eq.s32.totalorder %s9, 1
    %p103 = por %p101, %p102
    %p104 = scmp.ne.s32.totalorder %s96, %s99
    %p105 = scmp.eq.s32.totalorder %s9, 0
    %p106 = por %p104, %p105
    %p107 = scmp.ne.s32.totalorder %s96, %s99
    %p108 = scmp.eq.s32.totalorder %s14, 1
    %p109 = por %p107, %p108
    %p110 = scmp.ne.s32.totalorder %s99, %s100
    %p111 = scmp.eq.s32.totalorder %s14, 0
    %p112 = por %p110, %p111
    %p113 = scmp.ne.s32.totalorder %s99, %s100
    %p114 = scmp.eq.s32.totalorder %s15, 1
    %p115 = por %p113, %p114
    %p117 = scmp.ne.s32.totalorder %s100, %s116
    %p118 = scmp.eq.s32.totalorder %s15, 0
    %p119 = por %p117, %p118
    %s120 = ssub.s32 %s16, %s35
    %s121 = ssub.s32 %s17, %s31
    %s122 = sor.u32 %s120, %s121
    %p123 = scmp.eq.s32.totalorder %s122, 0
    %s125 = sadd.s32 %s124, 1
    %s126 = scalar_select %p123, %s124, %s125
    %p129 = pneg %p123
    %p130 = scmp.eq.s32.totalorder %s9, 1
    %p131 = por %p129, %p130
    %p132 = scmp.ne.s32.totalorder %s124, %s127
    %p133 = scmp.eq.s32.totalorder %s9, 0
    %p134 = por %p132, %p133
    %p135 = scmp.ne.s32.totalorder %s124, %s127
    %p136 = scmp.eq.s32.totalorder %s14, 1
    %p137 = por %p135, %p136
    %p138 = scmp.ne.s32.totalorder %s127, %s128
    %p139 = scmp.eq.s32.totalorder %s14, 0
    %p140 = por %p138, %p139
    %p141 = scmp.ne.s32.totalorder %s127, %s128
    %p142 = scmp.eq.s32.totalorder %s15, 1
    %p143 = por %p141, %p142
    %p145 = scmp.ne.s32.totalorder %s128, %s144
    %p146 = scmp.eq.s32.totalorder %s15, 0
    %p147 = por %p145, %p146
    %p148 = scmp.le.s32.totalorder 1, %s9
    %p149 = scmp.lt.s32.totalorder %s9, 3
    %p150 = pnand %p148, %p149
    %p151 = pneg %p150
    // Predicated region
    $region9: #{bert_layer_forward.6} parent=5 // pred_check
      _
    $region10: #{bert_layer_forward.6} parent=5 // pred_check_branch
      %153 = sbr.rel (%p150) target = $region12
    $region11: #{bert_layer_forward.6} parent=5 // pred_region
      %s154 = ssub.s32 %s9, 1
    $region12: #{bert_layer_forward.6} parent=5 // pred_fallthru
      _
    %p155 = scmp.lt.s32.totalorder %s9, 2
    // Predicated region
    $region13: #{bert_layer_forward.6} parent=5 // pred_check
      %p156 = pneg %p155
    $region14: #{bert_layer_forward.6} parent=5 // pred_check_branch
      %158 = sbr.rel (%p156) target = $region16
    $region15: #{bert_layer_forward.6} parent=5 // pred_region
      // Predicated region
      $region17: #{bert_layer_forward.6} parent=15 // pred_check
        %p159 = pneg %p50
      $region18: #{bert_layer_forward.6} parent=15 // pred_check_branch
        %161 = sbr.rel (%p159) target = $region20
      $region19: #{bert_layer_forward.6} parent=15 // pred_region
        %p162 = scmp.lt.s32.totalorder %s16, 1
        %s163 = scalar_select %p162, %s16, 1
        %p164 = scmp.lt.s32.totalorder %s17, 0
        %s165 = scalar_select %p164, %s17, 0
        %s166 = smul.addr %s163, 2
        %s167 = sadd.s32 %s165, %s166
        %s168 = smul.addr %s167, 4
        %s169 = scalar_lea.vmem %s0, %s168
      $region20: #{bert_layer_forward.6} parent=15 // pred_fallthru
        _
      // Predicated region
      $region21: #{bert_layer_forward.6} parent=15 // pred_check
        %p170 = pneg %p78
      $region22: #{bert_layer_forward.6} parent=15 // pred_check_branch
        %172 = sbr.rel (%p170) target = $region24
      $region23: #{bert_layer_forward.6} parent=15 // pred_region
        %p173 = scmp.lt.s32.totalorder %s16, 1
        %s174 = scalar_select %p173, %s16, 1
        %p175 = scmp.lt.s32.totalorder %s18, 0
        %s176 = scalar_select %p175, %s18, 0
        %s177 = smul.addr %s174, 2
        %s178 = sadd.s32 %s176, %s177
        %s179 = smul.addr %s178, 4
        %s180 = scalar_lea.vmem %s1, %s179
      $region24: #{bert_layer_forward.6} parent=15 // pred_fallthru
        _
      // Predicated region
      $region25: #{bert_layer_forward.6} parent=15 // pred_check
        %p181 = pneg %p106
      $region26: #{bert_layer_forward.6} parent=15 // pred_check_branch
        %183 = sbr.rel (%p181) target = $region28
      $region27: #{bert_layer_forward.6} parent=15 // pred_region
        %p184 = scmp.lt.s32.totalorder %s16, 1
        %s185 = scalar_select %p184, %s16, 1
        %p186 = scmp.lt.s32.totalorder %s18, 0
        %s187 = scalar_select %p186, %s18, 0
        %s188 = smul.addr %s185, 2
        %s189 = sadd.s32 %s187, %s188
        %s190 = smul.addr %s189, 4
        %s191 = scalar_lea.vmem %s2, %s190
      $region28: #{bert_layer_forward.6} parent=15 // pred_fallthru
        _
    $region16: #{bert_layer_forward.6} parent=5 // pred_fallthru
      _
    %p192 = scmp.le.s32.totalorder 1, %s9
    %p193 = scmp.lt.s32.totalorder %s9, 3
    %p194 = pnand %p192, %p193
    %p195 = pneg %p194
    // Predicated region
    $region29: #{bert_layer_forward.6} parent=5 // pred_check
      _
    $region30: #{bert_layer_forward.6} parent=5 // pred_check_branch
      %197 = sbr.rel (%p194) target = $region32
    $region31: #{bert_layer_forward.6} parent=5 // pred_region
      %s198 = ssub.s32 %s9, 1
      %p199 = scmp.lt.s32.totalorder %s19, 1
      %s200 = scalar_select %p199, %s19, 1
      %p201 = scmp.lt.s32.totalorder %s20, 0
      %s202 = scalar_select %p201, %s20, 0
      %s203 = smul.addr %s200, 2
      %s204 = sadd.s32 %s202, %s203
      %s205 = smul.addr %s204, 4
      %s206 = scalar_lea.vmem %s0, %s205
      %p207 = pneg %p56
      %p208 = pneg %p53
      %p209 = scmp.lt.s32.totalorder %s19, 1
      %s210 = scalar_select %p209, %s19, 1
      %p211 = scmp.lt.s32.totalorder %s21, 0
      %s212 = scalar_select %p211, %s21, 0
      %s213 = smul.addr %s210, 2
      %s214 = sadd.s32 %s212, %s213
      %s215 = smul.addr %s214, 4
      %s216 = scalar_lea.vmem %s1, %s215
      %p217 = pneg %p84
      %p218 = pneg %p81
      %p219 = scmp.lt.s32.totalorder %s19, 1
      %s220 = scalar_select %p219, %s19, 1
      %p221 = scmp.lt.s32.totalorder %s21, 0
      %s222 = scalar_select %p221, %s21, 0
      %s223 = smul.addr %s220, 2
      %s224 = sadd.s32 %s222, %s223
      %s225 = smul.addr %s224, 4
      %s226 = scalar_lea.vmem %s2, %s225
      %p227 = pneg %p112
      %p228 = pneg %p109
      %p229 = pneg %p140
      %p230 = pneg %p137
      %p231 = scmp.lt.s32.totalorder %s19, 1
      %s232 = scalar_select %p231, %s19, 1
      %p233 = scmp.lt.s32.totalorder %s20, 0
      %s234 = scalar_select %p233, %s20, 0
      %s235 = sadd.s32 %s234, %s232
      %s236 = smul.addr %s235, 4
      %s237 = scalar_lea.vmem %s3, %s236
      %p238 = scmp.lt.s32.totalorder %s19, 1
      %s239 = scalar_select %p238, %s19, 1
      %p240 = scmp.lt.s32.totalorder %s20, 0
      %s241 = scalar_select %p240, %s20, 0
      %s242 = smul.addr %s239, 2
      %s243 = sadd.s32 %s241, %s242
      %s244 = smul.addr %s243, 4
      %s245 = scalar_lea.vmem %s0, %s244
      %p246 = scmp.lt.s32.totalorder %s19, 1
      %s247 = scalar_select %p246, %s19, 1
      %p248 = scmp.lt.s32.totalorder %s21, 0
      %s249 = scalar_select %p248, %s21, 0
      %s250 = smul.addr %s247, 2
      %s251 = sadd.s32 %s249, %s250
      %s252 = smul.addr %s251, 4
      %s253 = scalar_lea.vmem %s1, %s252
      %p254 = scmp.lt.s32.totalorder %s19, 1
      %s255 = scalar_select %p254, %s19, 1
      %p256 = scmp.lt.s32.totalorder %s21, 0
      %s257 = scalar_select %p256, %s21, 0
      %s258 = smul.addr %s255, 2
      %s259 = sadd.s32 %s257, %s258
      %s260 = smul.addr %s259, 4
      %s261 = scalar_lea.vmem %s2, %s260
      %p262 = scmp.lt.s32.totalorder %s19, 1
      %s263 = scalar_select %p262, %s19, 1
      %p264 = scmp.lt.s32.totalorder %s20, 0
      %s265 = scalar_select %p264, %s20, 0
      %s266 = sadd.s32 %s265, %s263
      %s267 = smul.addr %s266, 4
      %s268 = scalar_lea.vmem %s3, %s267
      %p270 = scmp.eq.s32.totalorder %s21, 0
      // Predicated region
      $region33: #{bert_layer_forward.6} parent=31 // pred_check
        %p271 = pneg %p270
      $region34: #{bert_layer_forward.6} parent=31 // pred_check_branch
        %273 = sbr.rel (%p271) target = $region36
      $region35: #{bert_layer_forward.6} parent=31 // pred_region
        %vm274 = vcmask 58368
        %275 = vst.msk [vmem:[#allocation2] sm:$0x3] %vm274, -inf
        %276 = vst.msk [vmem:[#allocation3] sm:$0x3] %vm274, 0.0
        %vm277 = vcmask 130048
        %278 = vst.msk [vmem:[#allocation4] sm:$0xff] %vm277, 0.0
        %279 = vst.msk [vmem:[#allocation4 + $0x8] sm:$0xff] %vm277, 0.0
      $region36: #{bert_layer_forward.6} parent=31 // pred_fallthru
        _
      %v280 = vld [vmem:[%s245] sm:$0xf]
      %v281 = vld [vmem:[%s245 + $0x4] sm:$0xf]
      %v282 = vld [vmem:[%s253] sm:$0xf]
      %v283 = vld [vmem:[%s253 + $0x4] sm:$0xf]
      %v284 = vld [vmem:[%s261] sm:$0xf]
      %v285 = vld [vmem:[%s261 + $0x4] sm:$0xf]
      %vm286 = vcmask 130048
      %v288 = vsel %vm286, %v280, 0
      %v291 = vsel %vm286, %v282, 0
      %293 = vmatpush.bf16.xpose.msra.mxu0 0
      %294 = vmatpush.bf16.xpose.msra.mxu0 0
      %295 = vmatpush.bf16.xpose.msra.mxu0 0
      %296 = vmatpush.bf16.xpose.msra.mxu0 0
      %297 = vmatpush.bf16.xpose.msra.mxu0 0
      %298 = vmatpush.bf16.xpose.msra.mxu0 0
      %299 = vmatpush.bf16.xpose.msra.mxu0 0
      %300 = vmatpush.bf16.xpose.msra.mxu0 %v291
      %301 = vmatmul.bf16.gmra.mxu0 %v288
      %v302 = vpop.f32.mrf.mxu0
      %v303 = vadd.f32 0.0, %v302
      %v304 = vpop.f32.mrf.mxu0
      %305 = vdwg.mxu0
      %v307 = vsel %vm286, %v281, 0
      %v310 = vsel %vm286, %v283, 0
      %312 = vmatpush.bf16.xpose.msra.mxu0 0
      %313 = vmatpush.bf16.xpose.msra.mxu0 0
      %314 = vmatpush.bf16.xpose.msra.mxu0 0
      %315 = vmatpush.bf16.xpose.msra.mxu0 0
      %316 = vmatpush.bf16.xpose.msra.mxu0 0
      %317 = vmatpush.bf16.xpose.msra.mxu0 0
      %318 = vmatpush.bf16.xpose.msra.mxu0 0
      %319 = vmatpush.bf16.xpose.msra.mxu0 %v310
      %320 = vmatmul.bf16.gmra.mxu0 %v307
      %v321 = vpop.f32.mrf.mxu0
      %v322 = vadd.f32 0.0, %v321
      %v323 = vpop.f32.mrf.mxu0
      %324 = vdwg.mxu0
      %v325 = vmul.f32 %v303, 0.25
      %v326 = vmul.f32 %v322, 0.25
      %v327 = vld [vmem:[#allocation2] sm:$0x3]
      %vm328 = vcmask 64512
      %v329 = vsel %vm328, %v325, -inf
      %330 = vmax.xlane.f32.xlu0 %v329
      %v331 = vpop.xlane.xlu0 %330
      %v332 = vsel %vm328, %v326, -inf
      %333 = vmax.xlane.f32.xlu0 %v332
      %v334 = vpop.xlane.xlu0 %333
      %v337 = vlaneseq
      %v338 = vand.u32 %v337, 127
      %v339 = vperm.slane %v331, %v338
      %v340 = vperm.slane %v334, %v338
      %vm341 = vcmask 1041409
      %v342 = vsel %vm341, %v340, %v339
      %v344 = vmax.f32 %v327, %v342
      %v345 = vsub.f32 %v327, %v344
      %v346 = vmul.f32 %v345, 1.442695
      %v347 = vpow.pop %v346
      %v348 = vperm.slane %v344, 0
      %v349 = vlaneseq
      %v350 = vshrl.u32 %v349, 7
      %352 = vset.pattern.permute.xlu0 %v350
      %353 = vperm.xlu0 %352, %v348
      %v354 = vpop.permute.xlu0 %353
      %v355 = vperm.slane %v344, 1
      %v356 = vlaneseq
      %v357 = vshrl.u32 %v356, 7
      %359 = vset.pattern.permute.xlu0 %v357
      %360 = vperm.xlu0 %359, %v355
      %v361 = vpop.permute.xlu0 %360
      %v362 = vsub.f32 %v325, %v354
      %v363 = vsub.f32 %v326, %v361
      %v364 = vmul.f32 %v362, 1.442695
      %v365 = vpow.pop %v364
      %v366 = vmul.f32 %v363, 1.442695
      %v367 = vpow.pop %v366
      %v368 = vld [vmem:[#allocation3] sm:$0x3]
      %v369 = vmul.f32 %v347, %v368
      %v370 = vsel %vm328, %v365, 0.0
      %371 = vadd.xlane.f32.xlu0 %v370
      %v372 = vpop.xlane.xlu0 %371
      %v373 = vsel %vm328, %v367, 0.0
      %374 = vadd.xlane.f32.xlu0 %v373
      %v375 = vpop.xlane.xlu0 %374
      %v378 = vperm.slane %v372, %v338
      %v379 = vperm.slane %v375, %v338
      %v380 = vsel %vm341, %v379, %v378
      %v382 = vadd.f32 %v369, %v380
      %vm383 = vcmask 58368
      %384 = vst.msk [vmem:[#allocation3] sm:$0x3] %vm383, %v382
      %v385 = vperm.slane %v347, 0
      %v386 = vlaneseq
      %v387 = vshrl.u32 %v386, 7
      %389 = vset.pattern.permute.xlu0 %v387
      %390 = vperm.xlu0 %389, %v385
      %v391 = vpop.permute.xlu0 %390
      %v392 = vperm.slane %v347, 1
      %v393 = vlaneseq
      %v394 = vshrl.u32 %v393, 7
      %396 = vset.pattern.permute.xlu0 %v394
      %397 = vperm.xlu0 %396, %v392
      %v398 = vpop.permute.xlu0 %397
      %v399 = vld [vmem:[#allocation4] sm:$0xff]
      %v400 = vld [vmem:[#allocation4 + $0x8] sm:$0xff]
      %v401 = vmul.f32 %v391, %v399
      %v402 = vmul.f32 %v398, %v400
      %v403 = vpack.c.bf16 %v365, %v365
      %v404 = vpack.c.bf16 %v367, %v367
      %v406 = vsel %vm328, %v403, 0
      %vm408 = vcmask 1043456
      %v410 = vsel %vm408, %v284, 0
      %412 = vmatpush.bf16.msra.mxu0 0
      %413 = vmatpush.bf16.msra.mxu0 0
      %414 = vmatpush.bf16.msra.mxu0 0
      %415 = vmatpush.bf16.msra.mxu0 0
      %416 = vmatpush.bf16.msra.mxu0 0
      %417 = vmatpush.bf16.msra.mxu0 0
      %418 = vmatpush.bf16.msra.mxu0 0
      %419 = vmatpush.bf16.msra.mxu0 %v410
      %420 = vmatmul.bf16.gmra.mxu0 %v406
      %v421 = vpop.f32.mrf.mxu0
      %v422 = vadd.f32 0.0, %v421
      %v423 = vpop.f32.mrf.mxu0
      %424 = vdwg.mxu0
      %v426 = vsel %vm328, %v404, 0
      %v429 = vsel %vm408, %v285, 0
      %431 = vmatpush.bf16.msra.mxu0 0
      %432 = vmatpush.bf16.msra.mxu0 0
      %433 = vmatpush.bf16.msra.mxu0 0
      %434 = vmatpush.bf16.msra.mxu0 0
      %435 = vmatpush.bf16.msra.mxu0 0
      %436 = vmatpush.bf16.msra.mxu0 0
      %437 = vmatpush.bf16.msra.mxu0 0
      %438 = vmatpush.bf16.msra.mxu0 %v429
      %439 = vmatmul.bf16.gmra.mxu0 %v426
      %v440 = vpop.f32.mrf.mxu0
      %v441 = vadd.f32 0.0, %v440
      %v442 = vpop.f32.mrf.mxu0
      %443 = vdwg.mxu0
      %v444 = vadd.f32 %v401, %v422
      %v445 = vadd.f32 %v402, %v441
      %446 = vst.msk [vmem:[#allocation4] sm:$0xff] %vm286, %v444
      %447 = vst.msk [vmem:[#allocation4 + $0x8] sm:$0xff] %vm286, %v445
      %448 = vst.msk [vmem:[#allocation2] sm:$0x3] %vm383, %v344
      // Predicated region
      $region37: #{bert_layer_forward.6} parent=31 // pred_check
        %p449 = pneg %p270
      $region38: #{bert_layer_forward.6} parent=31 // pred_check_branch
        %451 = sbr.rel (%p449) target = $region40
      $region39: #{bert_layer_forward.6} parent=31 // pred_region
        %v452 = vld [vmem:[#allocation4] sm:$0xff]
        %v453 = vld [vmem:[#allocation4 + $0x8] sm:$0xff]
        %v454 = vld [vmem:[#allocation3] sm:$0x3]
        %v455 = vperm.slane %v454, 0
        %v456 = vlaneseq
        %v457 = vshrl.u32 %v456, 7
        %459 = vset.pattern.permute.xlu0 %v457
        %460 = vperm.xlu0 %459, %v455
        %v461 = vpop.permute.xlu0 %460
        %v462 = vperm.slane %v454, 1
        %v463 = vlaneseq
        %v464 = vshrl.u32 %v463, 7
        %466 = vset.pattern.permute.xlu0 %v464
        %467 = vperm.xlu0 %466, %v462
        %v468 = vpop.permute.xlu0 %467
        %v469 = vrcp.pop %v461
        %v470 = vmul.f32 %v461, %v469
        %v471 = vsub.f32 1.0, %v470
        %v472 = vmul.f32 %v469, %v471
        %v473 = vadd.f32 %v469, %v472
        %vm474 = vweird.f32 %v461
        %vm475 = vweird.f32 %v469
        %vm476 = vmor %vm474, %vm475
        %v477 = vsel %vm476, %v469, %v473
        %v478 = vand.u32 2147483647, %v461
        %vm479 = vcmp.eq.f32.partialorder %v478, 8.507059e+37
        %v480 = vand.u32 %v461, 2147483648
        %v481 = vor.u32 1.1754944e-38, %v480
        %v482 = vsel %vm479, %v481, %v477
        %v483 = vmul.f32 %v452, %v482
        %v484 = vrcp.pop %v468
        %v485 = vmul.f32 %v468, %v484
        %v486 = vsub.f32 1.0, %v485
        %v487 = vmul.f32 %v484, %v486
        %v488 = vadd.f32 %v484, %v487
        %vm489 = vweird.f32 %v468
        %vm490 = vweird.f32 %v484
        %vm491 = vmor %vm489, %vm490
        %v492 = vsel %vm491, %v484, %v488
        %v493 = vand.u32 2147483647, %v468
        %vm494 = vcmp.eq.f32.partialorder %v493, 8.507059e+37
        %v495 = vand.u32 %v468, 2147483648
        %v496 = vor.u32 1.1754944e-38, %v495
        %v497 = vsel %vm494, %v496, %v492
        %v498 = vmul.f32 %v453, %v497
        %v499 = vrot.slane %v483, 4
        %vm500 = vcmask 1047556
        %v501 = vsel %vm500, 0.0, %v499
        %v503 = vunpack.c.l.s4 1983009808
        %v504 = vunpack.c.0.s8 %v503
        %v505 = vperm.slane %v483, %v504
        %v507 = vunpack.c.l.s4 1983009808
        %v508 = vunpack.c.0.s8 %v507
        %v509 = vperm.slane %v501, %v508
        %v510 = vrot.slane %v498, 4
        %v511 = vsel %vm500, 0.0, %v510
        %v513 = vunpack.c.l.s4 1983009808
        %v514 = vunpack.c.0.s8 %v513
        %v515 = vperm.slane %v498, %v514
        %v517 = vunpack.c.l.s4 1983009808
        %v518 = vunpack.c.0.s8 %v517
        %v519 = vperm.slane %v511, %v518
        %v520 = vrot.slane %v515, 4
        %v521 = vsel %vm500, %v520, %v505
        %v522 = vrot.slane %v505, 4
        %v523 = vsel %vm500, %v515, %v522
        %v525 = vunpack.c.l.s4 1934713408
        %v526 = vunpack.c.0.s8 %v525
        %v527 = vperm.slane %v521, %v526
        %v529 = vunpack.c.l.s4 1934713408
        %v530 = vunpack.c.0.s8 %v529
        %v531 = vperm.slane %v523, %v530
        %v532 = vrot.slane %v519, 4
        %v533 = vsel %vm500, %v532, %v509
        %v534 = vrot.slane %v509, 4
        %v535 = vsel %vm500, %v519, %v534
        %v537 = vunpack.c.l.s4 1934713408
        %v538 = vunpack.c.0.s8 %v537
        %v539 = vperm.slane %v533, %v538
        %v541 = vunpack.c.l.s4 1934713408
        %v542 = vunpack.c.0.s8 %v541
        %v543 = vperm.slane %v535, %v542
        %v544 = vrot.slane %v527, 4
        %v545 = vsel %vm500, 0.0, %v544
        %v546 = vrot.slane %v531, 4
        %v547 = vsel %vm500, 0.0, %v546
        %v548 = vrot.slane %v539, 4
        %v549 = vsel %vm500, 0.0, %v548
        %v550 = vrot.slane %v543, 4
        %v551 = vsel %vm500, 0.0, %v550
        %v552 = vsel %vm500, %v546, %v527
        %v554 = vunpack.c.l.s4 1983009808
        %v555 = vunpack.c.0.s8 %v554
        %v556 = vperm.slane %v552, %v555
        %v557 = vrot.slane %v547, 4
        %v558 = vsel %vm500, %v557, %v545
        %v560 = vunpack.c.l.s4 1983009808
        %v561 = vunpack.c.0.s8 %v560
        %v562 = vperm.slane %v558, %v561
        %v563 = vsel %vm500, %v550, %v539
        %v565 = vunpack.c.l.s4 1983009808
        %v566 = vunpack.c.0.s8 %v565
        %v567 = vperm.slane %v563, %v566
        %v568 = vrot.slane %v551, 4
        %v569 = vsel %vm500, %v568, %v549
        %v571 = vunpack.c.l.s4 1983009808
        %v572 = vunpack.c.0.s8 %v571
        %v573 = vperm.slane %v569, %v572
        %v574 = vrot.slane %v562, 4
        %v575 = vsel %vm500, %v574, %v556
        %v577 = vunpack.c.l.s4 1934713408
        %v578 = vunpack.c.0.s8 %v577
        %v579 = vperm.slane %v575, %v578
        %v580 = vrot.slane %v573, 4
        %v581 = vsel %vm500, %v580, %v567
        %v583 = vunpack.c.l.s4 1934713408
        %v584 = vunpack.c.0.s8 %v583
        %v585 = vperm.slane %v581, %v584
        %v586 = vrot.slane %v585, 4
        %v587 = vsel %vm500, %v586, %v579
        %v588 = vrot.slane %v579, 4
        %v589 = vsel %vm500, %v585, %v588
        %591 = vrot.lane.b32.xlu0 %v589, 16
        %v592 = vpop.permute.xlu0 %591
        %v594 = vsel %vm286, %v587, %v592
        %v595 = vpack.c.bf16 %v594, %v594
        %vm596 = vcmask 257024
        %597 = vst.msk [vmem:[%s268] sm:$0xf] %vm596, %v595
      $region40: #{bert_layer_forward.6} parent=31 // pred_fallthru
        _
      %p598 = scmp.lt.s32.totalorder %s19, 1
      %s599 = scalar_select %p598, %s19, 1
      %p600 = scmp.lt.s32.totalorder %s20, 0
      %s601 = scalar_select %p600, %s20, 0
      %s602 = sadd.s32 %s601, %s599
      %s603 = smul.addr %s602, 4
      %s604 = scalar_lea.vmem %s3, %s603
      // Predicated region
      $region41: #{bert_layer_forward.6} parent=31 // pred_check
        %p605 = pneg %p137
      $region42: #{bert_layer_forward.6} parent=31 // pred_check_branch
        %607 = sbr.rel (%p605) target = $region44
      $region43: #{bert_layer_forward.6} parent=31 // pred_region
        _
      $region44: #{bert_layer_forward.6} parent=31 // pred_fallthru
        _
    $region32: #{bert_layer_forward.6} parent=5 // pred_fallthru
      _
    %p608 = scmp.le.s32.totalorder 2, %s9
    // Predicated region
    $region45: #{bert_layer_forward.6} parent=5 // pred_check
      %p609 = pneg %p608
    $region46: #{bert_layer_forward.6} parent=5 // pred_check_branch
      %611 = sbr.rel (%p609) target = $region48
    $region47: #{bert_layer_forward.6} parent=5 // pred_region
      %s612 = ssub.s32 %s9, 2
      // Predicated region
      $region49: #{bert_layer_forward.6} parent=47 // pred_check
        %p613 = pneg %p143
      $region50: #{bert_layer_forward.6} parent=47 // pred_check_branch
        %615 = sbr.rel (%p613) target = $region52
      $region51: #{bert_layer_forward.6} parent=47 // pred_region
        %p616 = scmp.lt.s32.totalorder %s22, 1
        %s617 = scalar_select %p616, %s22, 1
        %p618 = scmp.lt.s32.totalorder %s23, 0
        %s619 = scalar_select %p618, %s23, 0
        %s620 = sadd.s32 %s619, %s617
        %s621 = smul.addr %s620, 4
        %s622 = scalar_lea.vmem %s3, %s621
      $region52: #{bert_layer_forward.6} parent=47 // pred_fallthru
        _
    $region48: #{bert_layer_forward.6} parent=5 // pred_fallthru
      _
  $region6: #{bert_layer_forward.6} parent=0 // loop_footer
    %s13 = sadd.s32 1, %s9
  $region7: #{bert_layer_forward.6} parent=0 // loop_footer_branch
    %8 = sbr.rel target = $region3
  $region8: #{bert_layer_forward.6} parent=0 // loop_exit
    _

// kernel: bert_layer_forward.8
$region0: #{bert_layer_forward.8}
  #allocation0 [shape = 'u32[]', space=smem, size = 0x4, offset = 0x4, fixed_abs, tag = 'smem constant byte address 0x4 - core index']
  #allocation1 [shape = 'u32[72,128]{1,0:T(1,128)}', space=vmem, size = 0x9000, scoped, tag = 'internal scratch']
  %s0 = inlined_call_operand.vmem [shape: bf16[16,32], index: 0, kind: input, shape index: {}]
  %s1 = inlined_call_operand.vmem [shape: bf16[32,64], index: 1, kind: input, shape index: {}]
  %s2 = inlined_call_operand.vmem [shape: f32[1,64], index: 2, kind: input, shape index: {}]
  %s3 = inlined_call_operand.vmem [shape: bf16[16,64], index: 3, kind: output, shape index: {}]
  %s4 = sld [smem:[#allocation0]]
  $region22: #{bert_layer_forward.8} parent=0
    _
  %s6 = ssub.s32 1, %s4
  %s7 = scalar_select 0, %s6, %s4
  // Predicated region
  $region2: #{bert_layer_forward.8} parent=0 // pred_check
    _
  $region3: #{bert_layer_forward.8} parent=0 // pred_check_branch
    %9 = sbr.rel (0) target = $region5
  $region4: #{bert_layer_forward.8} parent=0 // pred_region
    _
  $region5: #{bert_layer_forward.8} parent=0 // pred_fallthru
    _
  // Predicated region
  $region6: #{bert_layer_forward.8} parent=0 // pred_check
    _
  $region7: #{bert_layer_forward.8} parent=0 // pred_check_branch
    %11 = sbr.rel (0) target = $region9
  $region8: #{bert_layer_forward.8} parent=0 // pred_region
    _
  $region9: #{bert_layer_forward.8} parent=0 // pred_fallthru
    _
  // Predicated region
  $region10: #{bert_layer_forward.8} parent=0 // pred_check
    _
  $region11: #{bert_layer_forward.8} parent=0 // pred_check_branch
    %13 = sbr.rel (0) target = $region13
  $region12: #{bert_layer_forward.8} parent=0 // pred_region
    _
  $region13: #{bert_layer_forward.8} parent=0 // pred_fallthru
    _
  %v15 = vld [vmem:[%s0] sm:$0xf]
  %v16 = vld [vmem:[%s0 + $0x4] sm:$0xf]
  %v17 = vld [vmem:[%s1] sm:$0xf]
  %v18 = vld [vmem:[%s1 + $0x4] sm:$0xf]
  %v19 = vld [vmem:[%s1 + $0x8] sm:$0xf]
  %v20 = vld [vmem:[%s1 + $0xc] sm:$0xf]
  %v21 = vld [vmem:[%s2] sm:$0x1]
  %v23 = vperm.slane %v21, 0
  %v27 = vunpack.c.l.b16 %v15
  %v28 = vunpack.c.l.b16 %v16
  %v29 = vpack.c.b16 %v28, %v27
  %v34 = vunpack.c.l.b16 %v17
  %v35 = vunpack.c.l.b16 %v18
  %v36 = vunpack.c.l.b16 %v19
  %v37 = vunpack.c.l.b16 %v20
  %v38 = vpack.c.b16 %v35, %v34
  %v39 = vpack.c.b16 %v37, %v36
  %vm42 = vcmask 261120
  %v44 = vsel %vm42, %v29, 0
  %46 = vmatpush.bf16.msra.mxu0 0
  %47 = vmatpush.bf16.msra.mxu0 0
  %48 = vmatpush.bf16.msra.mxu0 0
  %49 = vmatpush.bf16.msra.mxu0 0
  %50 = vmatpush.bf16.msra.mxu0 0
  %51 = vmatpush.bf16.msra.mxu0 0
  %52 = vmatpush.bf16.msra.mxu0 %v39
  %53 = vmatpush.bf16.msra.mxu0 %v38
  %54 = vmatmul.bf16.gmra.mxu0 %v44
  %v55 = vpop.f32.mrf.mxu0
  %v56 = vadd.f32 %v23, %v55
  %v57 = vpop.f32.mrf.mxu0
  %v58 = vadd.f32 %v23, %v57
  %59 = vdwg.mxu0
  %v60 = vmul.f32 %v56, 0.044715
  %v61 = vmul.f32 %v58, 0.044715
  %v62 = vmul.f32 %v60, %v56
  %v63 = vmul.f32 %v61, %v58
  %v64 = vmul.f32 %v62, %v56
  %v65 = vmul.f32 %v63, %v58
  %v66 = vadd.f32 %v56, %v64
  %v67 = vadd.f32 %v58, %v65
  %v68 = vmul.f32 %v66, 0.7978846
  %v69 = vmul.f32 %v67, 0.7978846
  %v70 = vtanh.pop %v68
  %v71 = vtanh.pop %v69
  %v72 = vmul.f32 %v56, 0.5
  %v73 = vmul.f32 %v58, 0.5
  %v74 = vadd.f32 %v70, 1.0
  %v75 = vadd.f32 %v71, 1.0
  %v76 = vmul.f32 %v72, %v74
  %v77 = vmul.f32 %v73, %v75
  %v78 = vpack.c.bf16 %v76, %v76
  %v79 = vpack.c.bf16 %v77, %v77
  %vm80 = vcmask 519168
  %81 = vst.msk [vmem:[%s3] sm:$0xf] %vm80, %v78
  %82 = vst.msk [vmem:[%s3 + $0x4] sm:$0xf] %vm80, %v79
  // Predicated region
  $region14: #{bert_layer_forward.8} parent=0 // pred_check
    _
  $region15: #{bert_layer_forward.8} parent=0 // pred_check_branch
    %84 = sbr.rel (0) target = $region17
  $region16: #{bert_layer_forward.8} parent=0 // pred_region
    _
  $region17: #{bert_layer_forward.8} parent=0 // pred_fallthru
    _
  // Predicated region
  $region18: #{bert_layer_forward.8} parent=0 // pred_check
    _
  $region19: #{bert_layer_forward.8} parent=0 // pred_check_branch
    %86 = sbr.rel (0) target = $region21
  $region20: #{bert_layer_forward.8} parent=0 // pred_region
    _
  $region21: #{bert_layer_forward.8} parent=0 // pred_fallthru
    _

// kernel: bert_layer_forward.9
$region0: #{bert_layer_forward.9}
  #allocation0 [shape = 'u32[]', space=smem, size = 0x4, offset = 0x4, fixed_abs, tag = 'smem constant byte address 0x4 - core index']
  #allocation1 [shape = 'u32[72,128]{1,0:T(1,128)}', space=vmem, size = 0x9000, scoped, tag = 'internal scratch']
  %s0 = inlined_call_operand.vmem [shape: bf16[16,64], index: 0, kind: input, shape index: {}]
  %s1 = inlined_call_operand.vmem [shape: bf16[64,32], index: 1, kind: input, shape index: {}]
  %s2 = inlined_call_operand.vmem [shape: f32[1,32], index: 2, kind: input, shape index: {}]
  %s3 = inlined_call_operand.vmem [shape: f32[16,32], index: 3, kind: input, shape index: {}]
  %s4 = inlined_call_operand.vmem [shape: f32[1,32], index: 4, kind: input, shape index: {}]
  %s5 = inlined_call_operand.vmem [shape: f32[1,32], index: 5, kind: input, shape index: {}]
  %s6 = inlined_call_operand.hbm [shape: f32[16,32], index: 6, kind: output, shape index: {0}]
  %s7 = inlined_call_operand.vmem [shape: f32[16,32], index: 7, kind: output, shape index: {1}]
  %8 = xla_tuple %s6, %s7
  %s9 = sld [smem:[#allocation0]]
  $region42: #{bert_layer_forward.9} parent=0
    _
  %s11 = ssub.s32 1, %s9
  %s12 = scalar_select 0, %s11, %s9
  $region1: #{bert_layer_forward.9} parent=0
    #allocation2 [shape = 'u8[8192]{0}', space=vmem, size = 0x2000, scoped, tag = 'output window, operand 0, single buffered']
    #allocation3 [shape = 's32[1]{0}', space=sflag, size = 0x4, scoped, tag = 'scoped memory for bert_layer_forward.9']
    %13 = vsyncpa [#allocation3], 0
    // Predicated region
    $region2: #{bert_layer_forward.9} parent=1 // pred_check
      _
    $region3: #{bert_layer_forward.9} parent=1 // pred_check_branch
      %15 = sbr.rel (0) target = $region5
    $region4: #{bert_layer_forward.9} parent=1 // pred_region
      _
    $region5: #{bert_layer_forward.9} parent=1 // pred_fallthru
      _
    // Predicated region
    $region6: #{bert_layer_forward.9} parent=1 // pred_check
      _
    $region7: #{bert_layer_forward.9} parent=1 // pred_check_branch
      %17 = sbr.rel (0) target = $region9
    $region8: #{bert_layer_forward.9} parent=1 // pred_region
      _
    $region9: #{bert_layer_forward.9} parent=1 // pred_fallthru
      _
    // Predicated region
    $region10: #{bert_layer_forward.9} parent=1 // pred_check
      _
    $region11: #{bert_layer_forward.9} parent=1 // pred_check_branch
      %19 = sbr.rel (0) target = $region13
    $region12: #{bert_layer_forward.9} parent=1 // pred_region
      _
    $region13: #{bert_layer_forward.9} parent=1 // pred_fallthru
      _
    // Predicated region
    $region14: #{bert_layer_forward.9} parent=1 // pred_check
      _
    $region15: #{bert_layer_forward.9} parent=1 // pred_check_branch
      %21 = sbr.rel (0) target = $region17
    $region16: #{bert_layer_forward.9} parent=1 // pred_region
      _
    $region17: #{bert_layer_forward.9} parent=1 // pred_fallthru
      _
    // Predicated region
    $region18: #{bert_layer_forward.9} parent=1 // pred_check
      _
    $region19: #{bert_layer_forward.9} parent=1 // pred_check_branch
      %23 = sbr.rel (0) target = $region21
    $region20: #{bert_layer_forward.9} parent=1 // pred_region
      _
    $region21: #{bert_layer_forward.9} parent=1 // pred_fallthru
      _
    // Predicated region
    $region22: #{bert_layer_forward.9} parent=1 // pred_check
      _
    $region23: #{bert_layer_forward.9} parent=1 // pred_check_branch
      %25 = sbr.rel (0) target = $region25
    $region24: #{bert_layer_forward.9} parent=1 // pred_region
      _
    $region25: #{bert_layer_forward.9} parent=1 // pred_fallthru
      _
    %v27 = vld [vmem:[%s0] sm:$0xf]
    %v28 = vld [vmem:[%s0 + $0x4] sm:$0xf]
    %v29 = vld [vmem:[%s1] sm:$0xf]
    %v30 = vld [vmem:[%s1 + $0x4] sm:$0xf]
    %v31 = vld [vmem:[%s1 + $0x8] sm:$0xf]
    %v32 = vld [vmem:[%s1 + $0xc] sm:$0xf]
    %v33 = vld [vmem:[%s1 + $0x10] sm:$0xf]
    %v34 = vld [vmem:[%s1 + $0x14] sm:$0xf]
    %v35 = vld [vmem:[%s1 + $0x18] sm:$0xf]
    %v36 = vld [vmem:[%s1 + $0x1c] sm:$0xf]
    %v37 = vld [vmem:[%s2] sm:$0x1]
    %v39 = vperm.slane %v37, 0
    %v43 = vunpack.c.l.b16 %v27
    %v44 = vunpack.c.l.b16 %v28
    %v45 = vpack.c.b16 %v44, %v43
    %v54 = vunpack.c.l.b16 %v29
    %v55 = vunpack.c.l.b16 %v30
    %v56 = vunpack.c.l.b16 %v31
    %v57 = vunpack.c.l.b16 %v32
    %v58 = vunpack.c.l.b16 %v33
    %v59 = vunpack.c.l.b16 %v34
    %v60 = vunpack.c.l.b16 %v35
    %v61 = vunpack.c.l.b16 %v36
    %v62 = vpack.c.b16 %v55, %v54
    %v63 = vpack.c.b16 %v57, %v56
    %v64 = vpack.c.b16 %v59, %v58
    %v65 = vpack.c.b16 %v61, %v60
    %vm70 = vcmask 523264
    %v72 = vsel %vm70, %v45, 0
    %74 = vmatpush.bf16.msra.mxu0 0
    %75 = vmatpush.bf16.msra.mxu0 0
    %76 = vmatpush.bf16.msra.mxu0 0
    %77 = vmatpush.bf16.msra.mxu0 0
    %78 = vmatpush.bf16.msra.mxu0 %v65
    %79 = vmatpush.bf16.msra.mxu0 %v64
    %80 = vmatpush.bf16.msra.mxu0 %v63
    %81 = vmatpush.bf16.msra.mxu0 %v62
    %82 = vmatmul.bf16.gmra.mxu0 %v72
    %v83 = vpop.f32.mrf.mxu0
    %v84 = vadd.f32 %v39, %v83
    %v85 = vpop.f32.mrf.mxu0
    %v86 = vadd.f32 %v39, %v85
    %87 = vdwg.mxu0
    %vm88 = vcmask 261120
    %89 = vst.msk [vmem:[#allocation2] sm:$0xff] %vm88, %v84
    %90 = vst.msk [vmem:[#allocation2 + $0x8] sm:$0xff] %vm88, %v86
    %v91 = vld [vmem:[%s3] sm:$0xff]
    %v92 = vld [vmem:[%s3 + $0x8] sm:$0xff]
    %v93 = vadd.f32 %v84, %v91
    %v94 = vadd.f32 %v86, %v92
    %v95 = vsel %vm88, %v93, 0.0
    %96 = vadd.xlane.f32.xlu0 %v95
    %v97 = vpop.xlane.xlu0 %96
    %v98 = vsel %vm88, %v94, 0.0
    %99 = vadd.xlane.f32.xlu0 %v98
    %v100 = vpop.xlane.xlu0 %99
    %v101 = vrcp.pop 32.0
    %v102 = vmul.f32 32.0, %v101
    %v103 = vsub.f32 1.0, %v102
    %v104 = vmul.f32 %v101, %v103
    %v105 = vadd.f32 %v101, %v104
    %vm106 = vweird.f32 %v101
    %v107 = vsel %vm106, %v101, %v105
    %v108 = vmul.f32 %v97, %v107
    %v109 = vmul.f32 %v100, %v107
    %v110 = vsub.f32 %v93, %v108
    %v111 = vsub.f32 %v94, %v109
    %v112 = vmul.f32 %v110, %v110
    %v113 = vmul.f32 %v111, %v111
    %v114 = vsel %vm88, %v112, 0.0
    %115 = vadd.xlane.f32.xlu0 %v114
    %v116 = vpop.xlane.xlu0 %115
    %v117 = vsel %vm88, %v113, 0.0
    %118 = vadd.xlane.f32.xlu0 %v117
    %v119 = vpop.xlane.xlu0 %118
    %v120 = vmul.f32 %v116, %v107
    %v121 = vmul.f32 %v119, %v107
    %v122 = vadd.f32 %v120, 1e-12
    %v123 = vadd.f32 %v121, 1e-12
    %v124 = vrsqrt.pop %v122
    %v125 = vmul.f32 %v124, %v122
    %v126 = vmul.f32 %v125, %v124
    %v127 = vmul.f32 0.5, %v126
    %v128 = vsub.f32 1.5, %v127
    %v129 = vmul.f32 %v124, %v128
    %vm130 = vweird.f32 %v122
    %vm131 = vweird.f32 %v124
    %vm132 = vmor %vm130, %vm131
    %v133 = vsel %vm132, %v124, %v129
    %v134 = vrsqrt.pop %v123
    %v135 = vmul.f32 %v134, %v123
    %v136 = vmul.f32 %v135, %v134
    %v137 = vmul.f32 0.5, %v136
    %v138 = vsub.f32 1.5, %v137
    %v139 = vmul.f32 %v134, %v138
    %vm140 = vweird.f32 %v123
    %vm141 = vweird.f32 %v134
    %vm142 = vmor %vm140, %vm141
    %v143 = vsel %vm142, %v134, %v139
    %v144 = vmul.f32 %v110, %v133
    %v145 = vmul.f32 %v111, %v143
    %v146 = vld [vmem:[%s4] sm:$0x1]
    %v148 = vperm.slane %v146, 0
    %v150 = vmul.f32 %v144, %v148
    %v151 = vmul.f32 %v145, %v148
    %v152 = vld [vmem:[%s5] sm:$0x1]
    %v154 = vperm.slane %v152, 0
    %v156 = vadd.f32 %v150, %v154
    %v157 = vadd.f32 %v151, %v154
    %158 = vst.msk [vmem:[%s7] sm:$0xff] %vm88, %v156
    %159 = vst.msk [vmem:[%s7 + $0x8] sm:$0xff] %vm88, %v157
    // Predicated region
    $region26: #{bert_layer_forward.9} parent=1 // pred_check
      _
    $region27: #{bert_layer_forward.9} parent=1 // pred_check_branch
      %161 = sbr.rel (0) target = $region29
    $region28: #{bert_layer_forward.9} parent=1 // pred_region
      %163 = vsyncadd [#allocation3], 0
      %s164 = sshll.u32 [#allocation2], 4
      %s165 = int_to_ptr.vmem [resolvable:$true] %s164
      %s166 = sshll.u32 %s6, 4
      %s167 = int_to_ptr.hbm [resolvable:$true] %s166
      %172 = dma.vmem_to_hbm [thread:$0]  %s165, 256, %s167, [#allocation3], 128, 128, 8
    $region29: #{bert_layer_forward.9} parent=1 // pred_fallthru
      _
    // Predicated region
    $region30: #{bert_layer_forward.9} parent=1 // pred_check
      _
    $region31: #{bert_layer_forward.9} parent=1 // pred_check_branch
      %174 = sbr.rel (0) target = $region33
    $region32: #{bert_layer_forward.9} parent=1 // pred_region
      _
    $region33: #{bert_layer_forward.9} parent=1 // pred_fallthru
      _
    // Predicated region
    $region34: #{bert_layer_forward.9} parent=1 // pred_check
      _
    $region35: #{bert_layer_forward.9} parent=1 // pred_check_branch
      %176 = sbr.rel (0) target = $region37
    $region36: #{bert_layer_forward.9} parent=1 // pred_region
      %178 = dma.done [#allocation3], 256
    $region37: #{bert_layer_forward.9} parent=1 // pred_fallthru
      _
    // Predicated region
    $region38: #{bert_layer_forward.9} parent=1 // pred_check
      _
    $region39: #{bert_layer_forward.9} parent=1 // pred_check_branch
      %180 = sbr.rel (0) target = $region41
    $region40: #{bert_layer_forward.9} parent=1 // pred_region
      _
    $region41: #{bert_layer_forward.9} parent=1 // pred_fallthru
      _
    %181 = vsyncpa [#allocation3], 1

</llo_original>
